<compile_context>
chip_gen: v7x
topology: tpu7x:2x2x1
jax: 0.10.0
libtpu: 0.0.40
codegen_flags: <defaults>
</compile_context>

<pallas_src>
import functools

import jax
import jax.numpy as jnp
import numpy as np
from jax.experimental import pallas as pl
from jax.experimental.pallas import tpu as pltpu

_MAX_ROW_BLOCK = 128  # row tile once B*T grows; tiny M collapses to a single step


# ----------------------------- Pallas kernel --------------------------------

def _fused_mlp_kernel(v_ref, a_ref, w1v_ref, w1a_ref, b1_ref, w2_ref, b2_ref, o_ref):
    # cat([v, a], -1) @ W1^T  ==  v @ W1v + a @ W1a   (W1v/W1a pre-transposed, bf16)
    h = (jnp.dot(v_ref[...].astype(jnp.bfloat16), w1v_ref[...],
                 preferred_element_type=jnp.float32)
         + jnp.dot(a_ref[...].astype(jnp.bfloat16), w1a_ref[...],
                   preferred_element_type=jnp.float32)
         + b1_ref[...])
    h = jnp.maximum(h, 0.0)                                   # ReLU (f32, VPU)
    out = (jnp.dot(h.astype(jnp.bfloat16), w2_ref[...],
                   preferred_element_type=jnp.float32)
           + b2_ref[...])                                     # (rows, 128) lane-dense
    o_ref[...] = out.astype(o_ref.dtype)                      # bf16 writeback


# ----------------------------- Wrapper ---------------------------------------

@functools.partial(jax.jit, static_argnums=(3,))
def video_audio_concat_forward(video, audio, kp, n_out):
    B, T, Dv = video.shape
    Da = audio.shape[-1]
    M = B * T
    H1 = kp["w1v_t"].shape[1]         # 512
    Np = kp["w2_t"].shape[1]          # 128 (88 padded to full lane width)

    v2 = video.reshape(M, Dv)
    a2 = audio.reshape(M, Da)

    # Single grid step for small M; 128-row tiles once B*T grows (amortizes the
    # one-time weight DMA and keeps the MXU M-tile full).
    if M > _MAX_ROW_BLOCK and M % _MAX_ROW_BLOCK == 0:
        rb = _MAX_ROW_BLOCK
    else:
        rb = M
    num_blocks = M // rb
    grid = (num_blocks,)

    # Don't megacore-shard a single-block grid (would duplicate weight DMA on v7x).
    semantics = ("arbitrary",) if num_blocks == 1 else ("parallel",)

    # Accurate (tiny) cost so XLA schedules/overlaps surrounding ops sensibly.
    weight_bytes = (kp["w1v_t"].size + kp["w1a_t"].size + kp["w2_t"].size) * 2 \
                   + (kp["b1"].size + kp["b2"].size) * 4
    io_bytes = M * (Dv + Da) * 4 + M * Np * 2
    flops = 2 * M * (Dv + Da) * H1 + 2 * M * H1 * Np
    cost = pl.CostEstimate(flops=flops, transcendentals=0,
                           bytes_accessed=weight_bytes + io_bytes)

    out = pl.pallas_call(
        _fused_mlp_kernel,
        out_shape=jax.ShapeDtypeStruct((M, Np), jnp.bfloat16),
        grid=grid,
        in_specs=[
            pl.BlockSpec((rb, Dv), lambda i: (i, 0)),     # video rows
            pl.BlockSpec((rb, Da), lambda i: (i, 0)),     # audio rows
            pl.BlockSpec((Dv, H1), lambda i: (0, 0)),     # W1 (video cols), (in,out) bf16
            pl.BlockSpec((Da, H1), lambda i: (0, 0)),     # W1 (audio cols), (in,out) bf16
            pl.BlockSpec((1, H1), lambda i: (0, 0)),      # b1 (f32)
            pl.BlockSpec((H1, Np), lambda i: (0, 0)),     # W2 padded, (in,out) bf16
            pl.BlockSpec((1, Np), lambda i: (0, 0)),      # b2 padded (f32)
        ],
        out_specs=pl.BlockSpec((rb, Np), lambda i: (i, 0)),
        compiler_params=pltpu.CompilerParams(
            dimension_semantics=semantics,
            vmem_limit_bytes=32 * 1024 * 1024),
        cost_estimate=cost,
    )(v2, a2, kp["w1v_t"], kp["w1a_t"], kp["b1"], kp["w2_t"], kp["b2"])

    return out[:, :n_out].reshape(B, T, n_out)


# ----------------------------- Parameters ------------------------------------

def init_params(key, video_dim, audio_dim, hidden=512, n_out=88):
    """PyTorch-style parameters: Linear weights are (out_features, in_features)."""
    k1, k2, k3, k4 = jax.random.split(key, 4)
    d_in = video_dim + audio_dim
    return {
        "w1": jax.random.normal(k1, (hidden, d_in), jnp.float32)
              / jnp.sqrt(jnp.float32(d_in)),
        "b1": 0.01 * jax.random.normal(k2, (hidden,), jnp.float32),
        "w2": jax.random.normal(k3, (n_out, hidden), jnp.float32)
              / jnp.sqrt(jnp.float32(hidden)),
        "b2": 0.01 * jax.random.normal(k4, (n_out,), jnp.float32),
    }


def prepare_kernel_params(params, video_dim, lane_pad=128):
    """One-time prep (outside the hot path): transpose to (in,out), split W1 into
    video/audio column blocks, pad the 88-wide classifier to 128 lanes, cast
    weights to bf16 (zero pad columns + zero bias => padded lanes stay inert)."""
    w1 = params["w1"]                               # (hidden, Dv+Da)
    hidden = w1.shape[0]
    n_out = params["w2"].shape[0]
    n_pad = ((n_out + lane_pad - 1) // lane_pad) * lane_pad

    w1_t = jnp.transpose(w1)                        # (Dv+Da, hidden)
    w2_t = jnp.transpose(params["w2"])              # (hidden, n_out)
    w2_t = jnp.pad(w2_t, ((0, 0), (0, n_pad - n_out)))
    b2_p = jnp.pad(params["b2"], (0, n_pad - n_out))

    return {
        "w1v_t": w1_t[:video_dim].astype(jnp.bfloat16),
        "w1a_t": w1_t[video_dim:].astype(jnp.bfloat16),
        "b1": params["b1"].reshape(1, hidden).astype(jnp.float32),
        "w2_t": w2_t.astype(jnp.bfloat16),
        "b2": b2_p.reshape(1, n_pad).astype(jnp.float32),
    }


# ----------------------------- Pure-JAX reference ----------------------------

_HI = jax.lax.Precision.HIGHEST


def _ref_forward(video, audio, params):
    x = jnp.concatenate([video, audio], axis=-1)
    h = jnp.einsum("...k,nk->...n", x, params["w1"], precision=_HI) + params["b1"]
    h = jnp.maximum(h, 0.0)
    return jnp.einsum("...k,nk->...n", h, params["w2"], precision=_HI) + params["b2"]


# ----------------------------- Main -------------------------------------------

if __name__ == "__main__":
    B, T = 2, 8
    video_dim, audio_dim = 768, 256   # module defaults
    n_out = 88

    key = jax.random.PRNGKey(0)
    kv, ka, kp = jax.random.split(key, 3)
    video = jax.random.normal(kv, (B, T, video_dim), jnp.float32)
    audio = jax.random.normal(ka, (B, T, audio_dim), jnp.float32)

    params = init_params(kp, video_dim, audio_dim, hidden=512, n_out=n_out)
    kparams = prepare_kernel_params(params, video_dim)

    logits = video_audio_concat_forward(video, audio, kparams, n_out)
    logits = jax.block_until_ready(logits)
    assert logits.shape == (B, T, n_out), logits.shape

    ref = jax.block_until_ready(_ref_forward(video, audio, params))
    np.testing.assert_allclose(np.asarray(logits, dtype=np.float32),
                               np.asarray(ref), rtol=5e-2, atol=5e-2)
    print("KERNEL_OK")
</pallas_src>

<mosaic_0001>
module attributes {stable_mosaic.version = 11 : i64} {
  func.func @_fused_mlp_kernel(%arg0: i32, %arg1: memref<16x768xf32, #tpu.memory_space<vmem>>, %arg2: memref<16x256xf32, #tpu.memory_space<vmem>>, %arg3: memref<768x512xbf16, #tpu.memory_space<vmem>>, %arg4: memref<256x512xbf16, #tpu.memory_space<vmem>>, %arg5: memref<1x512xf32, #tpu.memory_space<vmem>>, %arg6: memref<512x128xbf16, #tpu.memory_space<vmem>>, %arg7: memref<1x128xf32, #tpu.memory_space<vmem>>, %arg8: memref<16x128xbf16, #tpu.memory_space<vmem>>) attributes {dimension_semantics = [#tpu.dimension_semantics<arbitrary>], iteration_bounds = array<i64: 1>, scalar_prefetch = 0 : i64, scratch_operands = 0 : i64, tpu.core_type = #tpu.core_type<tc>, window_params = [{transform_indices = @transform_0, window_bounds = array<i64: 16, 768>}, {transform_indices = @transform_1, window_bounds = array<i64: 16, 256>}, {pipeline_mode = #tpu.pipeline_mode<synchronous>, transform_indices = @transform_2, window_bounds = array<i64: 768, 512>}, {pipeline_mode = #tpu.pipeline_mode<synchronous>, transform_indices = @transform_3, window_bounds = array<i64: 256, 512>}, {pipeline_mode = #tpu.pipeline_mode<synchronous>, transform_indices = @transform_4, window_bounds = array<i64: 1, 512>}, {pipeline_mode = #tpu.pipeline_mode<synchronous>, transform_indices = @transform_5, window_bounds = array<i64: 512, 128>}, {pipeline_mode = #tpu.pipeline_mode<synchronous>, transform_indices = @transform_6, window_bounds = array<i64: 1, 128>}, {transform_indices = @transform_7, window_bounds = array<i64: 16, 128>}]} {
    %c0 = arith.constant 0 : index
    %c0_0 = arith.constant 0 : index
    %0 = vector.load %arg1[%c0, %c0_0] : memref<16x768xf32, #tpu.memory_space<vmem>>, vector<16x768xf32>
    %1 = arith.truncf %0 : vector<16x768xf32> to vector<16x768xbf16>
    %c0_1 = arith.constant 0 : index
    %c0_2 = arith.constant 0 : index
    %2 = vector.load %arg3[%c0_1, %c0_2] : memref<768x512xbf16, #tpu.memory_space<vmem>>, vector<768x512xbf16>
    %cst = arith.constant dense<0.000000e+00> : vector<16x512xf32>
    %3 = tpu.matmul %1, %2, %cst {dimension_numbers = #tpu.dot_dimension_numbers<[1], [0], [0], [1], [0, 0, 1, 1], [], []>} : vector<16x768xbf16>, vector<768x512xbf16>, vector<16x512xf32> -> vector<16x512xf32>
    %c0_3 = arith.constant 0 : index
    %c0_4 = arith.constant 0 : index
    %4 = vector.load %arg2[%c0_3, %c0_4] : memref<16x256xf32, #tpu.memory_space<vmem>>, vector<16x256xf32>
    %5 = arith.truncf %4 : vector<16x256xf32> to vector<16x256xbf16>
    %c0_5 = arith.constant 0 : index
    %c0_6 = arith.constant 0 : index
    %6 = vector.load %arg4[%c0_5, %c0_6] : memref<256x512xbf16, #tpu.memory_space<vmem>>, vector<256x512xbf16>
    %cst_7 = arith.constant dense<0.000000e+00> : vector<16x512xf32>
    %7 = tpu.matmul %5, %6, %cst_7 {dimension_numbers = #tpu.dot_dimension_numbers<[1], [0], [0], [1], [0, 0, 1, 1], [], []>} : vector<16x256xbf16>, vector<256x512xbf16>, vector<16x512xf32> -> vector<16x512xf32>
    %8 = arith.addf %3, %7 : vector<16x512xf32>
    %c0_8 = arith.constant 0 : index
    %c0_9 = arith.constant 0 : index
    %9 = vector.load %arg5[%c0_8, %c0_9] : memref<1x512xf32, #tpu.memory_space<vmem>>, vector<1x512xf32>
    %10 = vector.broadcast %9 : vector<1x512xf32> to vector<16x512xf32>
    %11 = arith.addf %8, %10 : vector<16x512xf32>
    %cst_10 = arith.constant 0.000000e+00 : f32
    %12 = vector.broadcast %cst_10 : f32 to vector<16x512xf32>
    %13 = arith.maximumf %11, %12 : vector<16x512xf32>
    %14 = arith.truncf %13 : vector<16x512xf32> to vector<16x512xbf16>
    %c0_11 = arith.constant 0 : index
    %c0_12 = arith.constant 0 : index
    %15 = vector.load %arg6[%c0_11, %c0_12] : memref<512x128xbf16, #tpu.memory_space<vmem>>, vector<512x128xbf16>
    %cst_13 = arith.constant dense<0.000000e+00> : vector<16x128xf32>
    %16 = tpu.matmul %14, %15, %cst_13 {dimension_numbers = #tpu.dot_dimension_numbers<[1], [0], [0], [1], [0, 0, 1, 1], [], []>} : vector<16x512xbf16>, vector<512x128xbf16>, vector<16x128xf32> -> vector<16x128xf32>
    %c0_14 = arith.constant 0 : index
    %c0_15 = arith.constant 0 : index
    %17 = vector.load %arg7[%c0_14, %c0_15] : memref<1x128xf32, #tpu.memory_space<vmem>>, vector<1x128xf32>
    %18 = vector.broadcast %17 : vector<1x128xf32> to vector<16x128xf32>
    %19 = arith.addf %16, %18 : vector<16x128xf32>
    %20 = arith.truncf %19 : vector<16x128xf32> to vector<16x128xbf16>
    %c0_16 = arith.constant 0 : index
    %c0_17 = arith.constant 0 : index
    %21 = vector.load %arg8[%c0_16, %c0_17] : memref<16x128xbf16, #tpu.memory_space<vmem>>, vector<16x128xbf16>
    tpu.vector_store %arg8[%c0_16, %c0_17], %20 {strides = array<i32>} : memref<16x128xbf16, #tpu.memory_space<vmem>>, vector<16x128xbf16>,
    return
  }
  func.func @transform_0(%arg0: i32) -> (i32, i32) {
    %c0_i32 = arith.constant 0 : i32
    %c0_i32_0 = arith.constant 0 : i32
    return %arg0, %c0_i32 : i32, i32
  }
  func.func @transform_1(%arg0: i32) -> (i32, i32) {
    %c0_i32 = arith.constant 0 : i32
    %c0_i32_0 = arith.constant 0 : i32
    return %arg0, %c0_i32 : i32, i32
  }
  func.func @transform_2(%arg0: i32) -> (i32, i32) {
    %c0_i32 = arith.constant 0 : i32
    %c0_i32_0 = arith.constant 0 : i32
    %c0_i32_1 = arith.constant 0 : i32
    return %c0_i32, %c0_i32_0 : i32, i32
  }
  func.func @transform_3(%arg0: i32) -> (i32, i32) {
    %c0_i32 = arith.constant 0 : i32
    %c0_i32_0 = arith.constant 0 : i32
    %c0_i32_1 = arith.constant 0 : i32
    return %c0_i32, %c0_i32_0 : i32, i32
  }
  func.func @transform_4(%arg0: i32) -> (i32, i32) {
    %c0_i32 = arith.constant 0 : i32
    %c0_i32_0 = arith.constant 0 : i32
    %c0_i32_1 = arith.constant 0 : i32
    return %c0_i32, %c0_i32_0 : i32, i32
  }
  func.func @transform_5(%arg0: i32) -> (i32, i32) {
    %c0_i32 = arith.constant 0 : i32
    %c0_i32_0 = arith.constant 0 : i32
    %c0_i32_1 = arith.constant 0 : i32
    return %c0_i32, %c0_i32_0 : i32, i32
  }
  func.func @transform_6(%arg0: i32) -> (i32, i32) {
    %c0_i32 = arith.constant 0 : i32
    %c0_i32_0 = arith.constant 0 : i32
    %c0_i32_1 = arith.constant 0 : i32
    return %c0_i32, %c0_i32_0 : i32, i32
  }
  func.func @transform_7(%arg0: i32) -> (i32, i32) {
    %c0_i32 = arith.constant 0 : i32
    %c0_i32_0 = arith.constant 0 : i32
    return %arg0, %c0_i32 : i32, i32
  }
}

</mosaic_0001>

<llo_original>
// kernel: video_audio_concat_forward.1
$region0: #{video_audio_concat_forward.1}
  #allocation0 [shape = 'u32[]', space=smem, size = 0x4, offset = 0x4, fixed_abs, tag = 'smem constant byte address 0x4 - core index']
  #allocation1 [shape = 'u32[144,128]{1,0:T(1,128)}', space=vmem, size = 0x12000, scoped, tag = 'internal scratch']
  %s0 = inlined_call_operand.hbm [shape: f32[16,768], index: 0, kind: input, shape index: {}]
  %s1 = inlined_call_operand.hbm [shape: f32[16,256], index: 1, kind: input, shape index: {}]
  %s2 = inlined_call_operand.hbm [shape: bf16[768,512], index: 2, kind: input, shape index: {}]
  %s3 = inlined_call_operand.hbm [shape: bf16[256,512], index: 3, kind: input, shape index: {}]
  %s4 = inlined_call_operand.vmem [shape: f32[1,512], index: 4, kind: input, shape index: {}]
  %s5 = inlined_call_operand.hbm [shape: bf16[512,128], index: 5, kind: input, shape index: {}]
  %s6 = inlined_call_operand.vmem [shape: f32[1,128], index: 6, kind: input, shape index: {}]
  %s7 = inlined_call_operand.vmem [shape: bf16[16,128], index: 7, kind: output, shape index: {}]
  %s8 = sld [smem:[#allocation0]]
  $region58: #{video_audio_concat_forward.1} parent=0
    _
  %s10 = ssub.s32 1, %s8
  %s11 = scalar_select 0, %s10, %s8
  $region1: #{video_audio_concat_forward.1} parent=0
    #allocation2 [shape = 'u8[49152]{0}', space=vmem, size = 0xc000, scoped, tag = 'input window, operand 0, single buffered']
    #allocation3 [shape = 's32[1]{0}', space=sflag, size = 0x4, scoped, tag = 'scoped memory for video_audio_concat_forward.1']
    #allocation4 [shape = 'u8[16384]{0}', space=vmem, size = 0x4000, scoped, tag = 'input window, operand 1, single buffered']
    #allocation5 [shape = 's32[1]{0}', space=sflag, size = 0x4, scoped, tag = 'scoped memory for video_audio_concat_forward.1']
    #allocation6 [shape = 'u8[786432]{0}', space=vmem, size = 0xc0000, scoped, tag = 'input window, operand 2, single buffered']
    #allocation7 [shape = 'u8[262144]{0}', space=vmem, size = 0x40000, scoped, tag = 'input window, operand 3, single buffered']
    #allocation8 [shape = 's32[1]{0}', space=sflag, size = 0x4, scoped, tag = 'scoped memory for video_audio_concat_forward.1']
    #allocation9 [shape = 'u8[131072]{0}', space=vmem, size = 0x20000, scoped, tag = 'input window, operand 5, single buffered']
    %12 = vsyncpa [#allocation3], 0
    %13 = vsyncpa [#allocation5], 0
    %14 = vsyncpa [#allocation8], 0
    // Predicated region
    $region2: #{video_audio_concat_forward.1} parent=1 // pred_check
      _
    $region3: #{video_audio_concat_forward.1} parent=1 // pred_check_branch
      %16 = sbr.rel (0) target = $region5
    $region4: #{video_audio_concat_forward.1} parent=1 // pred_region
      %s18 = ssub.s32 1536, 1536
      %19 = vsyncadd [#allocation3], %s18
      %s20 = sshll.u32 [#allocation2], 4
      %s21 = int_to_ptr.vmem [resolvable:$true] %s20
      %26 = dma.hbm_to_vmem [thread:$0]  %s0, 1536, %s21, [#allocation3], 768, 768, 48
    $region5: #{video_audio_concat_forward.1} parent=1 // pred_fallthru
      _
    // Predicated region
    $region6: #{video_audio_concat_forward.1} parent=1 // pred_check
      _
    $region7: #{video_audio_concat_forward.1} parent=1 // pred_check_branch
      %28 = sbr.rel (0) target = $region9
    $region8: #{video_audio_concat_forward.1} parent=1 // pred_region
      %s30 = ssub.s32 512, 512
      %31 = vsyncadd [#allocation5], %s30
      %s32 = sshll.u32 [#allocation4], 4
      %s33 = int_to_ptr.vmem [resolvable:$true] %s32
      %38 = dma.hbm_to_vmem [thread:$0]  %s1, 512, %s33, [#allocation5], 256, 256, 16
    $region9: #{video_audio_concat_forward.1} parent=1 // pred_fallthru
      _
    // Predicated region
    $region10: #{video_audio_concat_forward.1} parent=1 // pred_check
      _
    $region11: #{video_audio_concat_forward.1} parent=1 // pred_check_branch
      %40 = sbr.rel (0) target = $region13
    $region12: #{video_audio_concat_forward.1} parent=1 // pred_region
      %s42 = ssub.s32 24576, 24576
      %43 = vsyncadd [#allocation5], %s42
      %s44 = sshll.u32 [#allocation6], 4
      %s45 = int_to_ptr.vmem [resolvable:$true] %s44
      %50 = dma.hbm_to_vmem [thread:$0]  %s2, 24576, %s45, [#allocation5], 256, 256, 16
    $region13: #{video_audio_concat_forward.1} parent=1 // pred_fallthru
      _
    // Predicated region
    $region14: #{video_audio_concat_forward.1} parent=1 // pred_check
      _
    $region15: #{video_audio_concat_forward.1} parent=1 // pred_check_branch
      %52 = sbr.rel (0) target = $region17
    $region16: #{video_audio_concat_forward.1} parent=1 // pred_region
      %s54 = ssub.s32 8192, 8192
      %55 = vsyncadd [#allocation8], %s54
      %s56 = sshll.u32 [#allocation7], 4
      %s57 = int_to_ptr.vmem [resolvable:$true] %s56
      %62 = dma.hbm_to_vmem [thread:$0]  %s3, 8192, %s57, [#allocation8], 256, 256, 16
    $region17: #{video_audio_concat_forward.1} parent=1 // pred_fallthru
      _
    // Predicated region
    $region18: #{video_audio_concat_forward.1} parent=1 // pred_check
      _
    $region19: #{video_audio_concat_forward.1} parent=1 // pred_check_branch
      %64 = sbr.rel (0) target = $region21
    $region20: #{video_audio_concat_forward.1} parent=1 // pred_region
      _
    $region21: #{video_audio_concat_forward.1} parent=1 // pred_fallthru
      _
    // Predicated region
    $region22: #{video_audio_concat_forward.1} parent=1 // pred_check
      _
    $region23: #{video_audio_concat_forward.1} parent=1 // pred_check_branch
      %66 = sbr.rel (0) target = $region25
    $region24: #{video_audio_concat_forward.1} parent=1 // pred_region
      %s68 = ssub.s32 4096, 4096
      %69 = vsyncadd [#allocation8], %s68
      %s70 = sshll.u32 [#allocation9], 4
      %s71 = int_to_ptr.vmem [resolvable:$true] %s70
      %76 = dma.hbm_to_vmem [thread:$0]  %s5, 4096, %s71, [#allocation8], 64, 64, 4
    $region25: #{video_audio_concat_forward.1} parent=1 // pred_fallthru
      _
    // Predicated region
    $region26: #{video_audio_concat_forward.1} parent=1 // pred_check
      _
    $region27: #{video_audio_concat_forward.1} parent=1 // pred_check_branch
      %78 = sbr.rel (0) target = $region29
    $region28: #{video_audio_concat_forward.1} parent=1 // pred_region
      _
    $region29: #{video_audio_concat_forward.1} parent=1 // pred_fallthru
      _
    // Predicated region
    $region30: #{video_audio_concat_forward.1} parent=1 // pred_check
      _
    $region31: #{video_audio_concat_forward.1} parent=1 // pred_check_branch
      %80 = sbr.rel (0) target = $region33
    $region32: #{video_audio_concat_forward.1} parent=1 // pred_region
      %81 = dma.done [#allocation3], 1536
    $region33: #{video_audio_concat_forward.1} parent=1 // pred_fallthru
      _
    // Predicated region
    $region34: #{video_audio_concat_forward.1} parent=1 // pred_check
      _
    $region35: #{video_audio_concat_forward.1} parent=1 // pred_check_branch
      %83 = sbr.rel (0) target = $region37
    $region36: #{video_audio_concat_forward.1} parent=1 // pred_region
      %84 = dma.done [#allocation5], 512
    $region37: #{video_audio_concat_forward.1} parent=1 // pred_fallthru
      _
    // Predicated region
    $region38: #{video_audio_concat_forward.1} parent=1 // pred_check
      _
    $region39: #{video_audio_concat_forward.1} parent=1 // pred_check_branch
      %86 = sbr.rel (0) target = $region41
    $region40: #{video_audio_concat_forward.1} parent=1 // pred_region
      %87 = dma.done [#allocation5], 24576
    $region41: #{video_audio_concat_forward.1} parent=1 // pred_fallthru
      _
    // Predicated region
    $region42: #{video_audio_concat_forward.1} parent=1 // pred_check
      _
    $region43: #{video_audio_concat_forward.1} parent=1 // pred_check_branch
      %89 = sbr.rel (0) target = $region45
    $region44: #{video_audio_concat_forward.1} parent=1 // pred_region
      %90 = dma.done [#allocation8], 8192
    $region45: #{video_audio_concat_forward.1} parent=1 // pred_fallthru
      _
    // Predicated region
    $region46: #{video_audio_concat_forward.1} parent=1 // pred_check
      _
    $region47: #{video_audio_concat_forward.1} parent=1 // pred_check_branch
      %92 = sbr.rel (0) target = $region49
    $region48: #{video_audio_concat_forward.1} parent=1 // pred_region
      %93 = dma.done [#allocation8], 4096
    $region49: #{video_audio_concat_forward.1} parent=1 // pred_fallthru
      _
    %v95 = vld [vmem:[#allocation2] sm:$0xff]
    %v96 = vld [vmem:[#allocation2 + $0x8] sm:$0xff]
    %v97 = vld [vmem:[#allocation2 + $0x10] sm:$0xff]
    %v98 = vld [vmem:[#allocation2 + $0x18] sm:$0xff]
    %v99 = vld [vmem:[#allocation2 + $0x20] sm:$0xff]
    %v100 = vld [vmem:[#allocation2 + $0x28] sm:$0xff]
    %v101 = vld [vmem:[#allocation2 + $0x30] sm:$0xff]
    %v102 = vld [vmem:[#allocation2 + $0x38] sm:$0xff]
    %v103 = vld [vmem:[#allocation2 + $0x40] sm:$0xff]
    %v104 = vld [vmem:[#allocation2 + $0x48] sm:$0xff]
    %v105 = vld [vmem:[#allocation2 + $0x50] sm:$0xff]
    %v106 = vld [vmem:[#allocation2 + $0x58] sm:$0xff]
    %v107 = vpack.c.bf16 %v101, %v95
    %v108 = vpack.c.bf16 %v102, %v96
    %v109 = vpack.c.bf16 %v103, %v97
    %v110 = vpack.c.bf16 %v104, %v98
    %v111 = vpack.c.bf16 %v105, %v99
    %v112 = vpack.c.bf16 %v106, %v100
    %v113 = vld [vmem:[#allocation6] sm:$0xff]
    %v114 = vld [vmem:[#allocation6 + $0x8] sm:$0xff]
    %v115 = vld [vmem:[#allocation6 + $0x10] sm:$0xff]
    %v116 = vld [vmem:[#allocation6 + $0x18] sm:$0xff]
    %v117 = vld [vmem:[#allocation6 + $0x20] sm:$0xff]
    %v118 = vld [vmem:[#allocation6 + $0x28] sm:$0xff]
    %v119 = vld [vmem:[#allocation6 + $0x30] sm:$0xff]
    %v120 = vld [vmem:[#allocation6 + $0x38] sm:$0xff]
    %v121 = vld [vmem:[#allocation6 + $0x40] sm:$0xff]
    %v122 = vld [vmem:[#allocation6 + $0x48] sm:$0xff]
    %v123 = vld [vmem:[#allocation6 + $0x50] sm:$0xff]
    %v124 = vld [vmem:[#allocation6 + $0x58] sm:$0xff]
    %v125 = vld [vmem:[#allocation6 + $0x60] sm:$0xff]
    %v126 = vld [vmem:[#allocation6 + $0x68] sm:$0xff]
    %v127 = vld [vmem:[#allocation6 + $0x70] sm:$0xff]
    %v128 = vld [vmem:[#allocation6 + $0x78] sm:$0xff]
    %v129 = vld [vmem:[#allocation6 + $0x80] sm:$0xff]
    %v130 = vld [vmem:[#allocation6 + $0x88] sm:$0xff]
    %v131 = vld [vmem:[#allocation6 + $0x90] sm:$0xff]
    %v132 = vld [vmem:[#allocation6 + $0x98] sm:$0xff]
    %v133 = vld [vmem:[#allocation6 + $0xa0] sm:$0xff]
    %v134 = vld [vmem:[#allocation6 + $0xa8] sm:$0xff]
    %v135 = vld [vmem:[#allocation6 + $0xb0] sm:$0xff]
    %v136 = vld [vmem:[#allocation6 + $0xb8] sm:$0xff]
    %v137 = vld [vmem:[#allocation6 + $0xc0] sm:$0xff]
    %v138 = vld [vmem:[#allocation6 + $0xc8] sm:$0xff]
    %v139 = vld [vmem:[#allocation6 + $0xd0] sm:$0xff]
    %v140 = vld [vmem:[#allocation6 + $0xd8] sm:$0xff]
    %v141 = vld [vmem:[#allocation6 + $0xe0] sm:$0xff]
    %v142 = vld [vmem:[#allocation6 + $0xe8] sm:$0xff]
    %v143 = vld [vmem:[#allocation6 + $0xf0] sm:$0xff]
    %v144 = vld [vmem:[#allocation6 + $0xf8] sm:$0xff]
    %v145 = vld [vmem:[#allocation6 + $0x100] sm:$0xff]
    %v146 = vld [vmem:[#allocation6 + $0x108] sm:$0xff]
    %v147 = vld [vmem:[#allocation6 + $0x110] sm:$0xff]
    %v148 = vld [vmem:[#allocation6 + $0x118] sm:$0xff]
    %v149 = vld [vmem:[#allocation6 + $0x120] sm:$0xff]
    %v150 = vld [vmem:[#allocation6 + $0x128] sm:$0xff]
    %v151 = vld [vmem:[#allocation6 + $0x130] sm:$0xff]
    %v152 = vld [vmem:[#allocation6 + $0x138] sm:$0xff]
    %v153 = vld [vmem:[#allocation6 + $0x140] sm:$0xff]
    %v154 = vld [vmem:[#allocation6 + $0x148] sm:$0xff]
    %v155 = vld [vmem:[#allocation6 + $0x150] sm:$0xff]
    %v156 = vld [vmem:[#allocation6 + $0x158] sm:$0xff]
    %v157 = vld [vmem:[#allocation6 + $0x160] sm:$0xff]
    %v158 = vld [vmem:[#allocation6 + $0x168] sm:$0xff]
    %v159 = vld [vmem:[#allocation6 + $0x170] sm:$0xff]
    %v160 = vld [vmem:[#allocation6 + $0x178] sm:$0xff]
    %v161 = vld [vmem:[#allocation6 + $0x180] sm:$0xff]
    %v162 = vld [vmem:[#allocation6 + $0x188] sm:$0xff]
    %v163 = vld [vmem:[#allocation6 + $0x190] sm:$0xff]
    %v164 = vld [vmem:[#allocation6 + $0x198] sm:$0xff]
    %v165 = vld [vmem:[#allocation6 + $0x1a0] sm:$0xff]
    %v166 = vld [vmem:[#allocation6 + $0x1a8] sm:$0xff]
    %v167 = vld [vmem:[#allocation6 + $0x1b0] sm:$0xff]
    %v168 = vld [vmem:[#allocation6 + $0x1b8] sm:$0xff]
    %v169 = vld [vmem:[#allocation6 + $0x1c0] sm:$0xff]
    %v170 = vld [vmem:[#allocation6 + $0x1c8] sm:$0xff]
    %v171 = vld [vmem:[#allocation6 + $0x1d0] sm:$0xff]
    %v172 = vld [vmem:[#allocation6 + $0x1d8] sm:$0xff]
    %v173 = vld [vmem:[#allocation6 + $0x1e0] sm:$0xff]
    %v174 = vld [vmem:[#allocation6 + $0x1e8] sm:$0xff]
    %v175 = vld [vmem:[#allocation6 + $0x1f0] sm:$0xff]
    %v176 = vld [vmem:[#allocation6 + $0x1f8] sm:$0xff]
    %v177 = vld [vmem:[#allocation6 + $0x200] sm:$0xff]
    %v178 = vld [vmem:[#allocation6 + $0x208] sm:$0xff]
    %v179 = vld [vmem:[#allocation6 + $0x210] sm:$0xff]
    %v180 = vld [vmem:[#allocation6 + $0x218] sm:$0xff]
    %v181 = vld [vmem:[#allocation6 + $0x220] sm:$0xff]
    %v182 = vld [vmem:[#allocation6 + $0x228] sm:$0xff]
    %v183 = vld [vmem:[#allocation6 + $0x230] sm:$0xff]
    %v184 = vld [vmem:[#allocation6 + $0x238] sm:$0xff]
    %v185 = vld [vmem:[#allocation6 + $0x240] sm:$0xff]
    %v186 = vld [vmem:[#allocation6 + $0x248] sm:$0xff]
    %v187 = vld [vmem:[#allocation6 + $0x250] sm:$0xff]
    %v188 = vld [vmem:[#allocation6 + $0x258] sm:$0xff]
    %v189 = vld [vmem:[#allocation6 + $0x260] sm:$0xff]
    %v190 = vld [vmem:[#allocation6 + $0x268] sm:$0xff]
    %v191 = vld [vmem:[#allocation6 + $0x270] sm:$0xff]
    %v192 = vld [vmem:[#allocation6 + $0x278] sm:$0xff]
    %v193 = vld [vmem:[#allocation6 + $0x280] sm:$0xff]
    %v194 = vld [vmem:[#allocation6 + $0x288] sm:$0xff]
    %v195 = vld [vmem:[#allocation6 + $0x290] sm:$0xff]
    %v196 = vld [vmem:[#allocation6 + $0x298] sm:$0xff]
    %v197 = vld [vmem:[#allocation6 + $0x2a0] sm:$0xff]
    %v198 = vld [vmem:[#allocation6 + $0x2a8] sm:$0xff]
    %v199 = vld [vmem:[#allocation6 + $0x2b0] sm:$0xff]
    %v200 = vld [vmem:[#allocation6 + $0x2b8] sm:$0xff]
    %v201 = vld [vmem:[#allocation6 + $0x2c0] sm:$0xff]
    %v202 = vld [vmem:[#allocation6 + $0x2c8] sm:$0xff]
    %v203 = vld [vmem:[#allocation6 + $0x2d0] sm:$0xff]
    %v204 = vld [vmem:[#allocation6 + $0x2d8] sm:$0xff]
    %v205 = vld [vmem:[#allocation6 + $0x2e0] sm:$0xff]
    %v206 = vld [vmem:[#allocation6 + $0x2e8] sm:$0xff]
    %v207 = vld [vmem:[#allocation6 + $0x2f0] sm:$0xff]
    %v208 = vld [vmem:[#allocation6 + $0x2f8] sm:$0xff]
    %v209 = vld [vmem:[#allocation6 + $0x300] sm:$0xff]
    %v210 = vld [vmem:[#allocation6 + $0x308] sm:$0xff]
    %v211 = vld [vmem:[#allocation6 + $0x310] sm:$0xff]
    %v212 = vld [vmem:[#allocation6 + $0x318] sm:$0xff]
    %v213 = vld [vmem:[#allocation6 + $0x320] sm:$0xff]
    %v214 = vld [vmem:[#allocation6 + $0x328] sm:$0xff]
    %v215 = vld [vmem:[#allocation6 + $0x330] sm:$0xff]
    %v216 = vld [vmem:[#allocation6 + $0x338] sm:$0xff]
    %v217 = vld [vmem:[#allocation6 + $0x340] sm:$0xff]
    %v218 = vld [vmem:[#allocation6 + $0x348] sm:$0xff]
    %v219 = vld [vmem:[#allocation6 + $0x350] sm:$0xff]
    %v220 = vld [vmem:[#allocation6 + $0x358] sm:$0xff]
    %v221 = vld [vmem:[#allocation6 + $0x360] sm:$0xff]
    %v222 = vld [vmem:[#allocation6 + $0x368] sm:$0xff]
    %v223 = vld [vmem:[#allocation6 + $0x370] sm:$0xff]
    %v224 = vld [vmem:[#allocation6 + $0x378] sm:$0xff]
    %v225 = vld [vmem:[#allocation6 + $0x380] sm:$0xff]
    %v226 = vld [vmem:[#allocation6 + $0x388] sm:$0xff]
    %v227 = vld [vmem:[#allocation6 + $0x390] sm:$0xff]
    %v228 = vld [vmem:[#allocation6 + $0x398] sm:$0xff]
    %v229 = vld [vmem:[#allocation6 + $0x3a0] sm:$0xff]
    %v230 = vld [vmem:[#allocation6 + $0x3a8] sm:$0xff]
    %v231 = vld [vmem:[#allocation6 + $0x3b0] sm:$0xff]
    %v232 = vld [vmem:[#allocation6 + $0x3b8] sm:$0xff]
    %v233 = vld [vmem:[#allocation6 + $0x3c0] sm:$0xff]
    %v234 = vld [vmem:[#allocation6 + $0x3c8] sm:$0xff]
    %v235 = vld [vmem:[#allocation6 + $0x3d0] sm:$0xff]
    %v236 = vld [vmem:[#allocation6 + $0x3d8] sm:$0xff]
    %v237 = vld [vmem:[#allocation6 + $0x3e0] sm:$0xff]
    %v238 = vld [vmem:[#allocation6 + $0x3e8] sm:$0xff]
    %v239 = vld [vmem:[#allocation6 + $0x3f0] sm:$0xff]
    %v240 = vld [vmem:[#allocation6 + $0x3f8] sm:$0xff]
    %v241 = vld [vmem:[#allocation6 + $0x400] sm:$0xff]
    %v242 = vld [vmem:[#allocation6 + $0x408] sm:$0xff]
    %v243 = vld [vmem:[#allocation6 + $0x410] sm:$0xff]
    %v244 = vld [vmem:[#allocation6 + $0x418] sm:$0xff]
    %v245 = vld [vmem:[#allocation6 + $0x420] sm:$0xff]
    %v246 = vld [vmem:[#allocation6 + $0x428] sm:$0xff]
    %v247 = vld [vmem:[#allocation6 + $0x430] sm:$0xff]
    %v248 = vld [vmem:[#allocation6 + $0x438] sm:$0xff]
    %v249 = vld [vmem:[#allocation6 + $0x440] sm:$0xff]
    %v250 = vld [vmem:[#allocation6 + $0x448] sm:$0xff]
    %v251 = vld [vmem:[#allocation6 + $0x450] sm:$0xff]
    %v252 = vld [vmem:[#allocation6 + $0x458] sm:$0xff]
    %v253 = vld [vmem:[#allocation6 + $0x460] sm:$0xff]
    %v254 = vld [vmem:[#allocation6 + $0x468] sm:$0xff]
    %v255 = vld [vmem:[#allocation6 + $0x470] sm:$0xff]
    %v256 = vld [vmem:[#allocation6 + $0x478] sm:$0xff]
    %v257 = vld [vmem:[#allocation6 + $0x480] sm:$0xff]
    %v258 = vld [vmem:[#allocation6 + $0x488] sm:$0xff]
    %v259 = vld [vmem:[#allocation6 + $0x490] sm:$0xff]
    %v260 = vld [vmem:[#allocation6 + $0x498] sm:$0xff]
    %v261 = vld [vmem:[#allocation6 + $0x4a0] sm:$0xff]
    %v262 = vld [vmem:[#allocation6 + $0x4a8] sm:$0xff]
    %v263 = vld [vmem:[#allocation6 + $0x4b0] sm:$0xff]
    %v264 = vld [vmem:[#allocation6 + $0x4b8] sm:$0xff]
    %v265 = vld [vmem:[#allocation6 + $0x4c0] sm:$0xff]
    %v266 = vld [vmem:[#allocation6 + $0x4c8] sm:$0xff]
    %v267 = vld [vmem:[#allocation6 + $0x4d0] sm:$0xff]
    %v268 = vld [vmem:[#allocation6 + $0x4d8] sm:$0xff]
    %v269 = vld [vmem:[#allocation6 + $0x4e0] sm:$0xff]
    %v270 = vld [vmem:[#allocation6 + $0x4e8] sm:$0xff]
    %v271 = vld [vmem:[#allocation6 + $0x4f0] sm:$0xff]
    %v272 = vld [vmem:[#allocation6 + $0x4f8] sm:$0xff]
    %v273 = vld [vmem:[#allocation6 + $0x500] sm:$0xff]
    %v274 = vld [vmem:[#allocation6 + $0x508] sm:$0xff]
    %v275 = vld [vmem:[#allocation6 + $0x510] sm:$0xff]
    %v276 = vld [vmem:[#allocation6 + $0x518] sm:$0xff]
    %v277 = vld [vmem:[#allocation6 + $0x520] sm:$0xff]
    %v278 = vld [vmem:[#allocation6 + $0x528] sm:$0xff]
    %v279 = vld [vmem:[#allocation6 + $0x530] sm:$0xff]
    %v280 = vld [vmem:[#allocation6 + $0x538] sm:$0xff]
    %v281 = vld [vmem:[#allocation6 + $0x540] sm:$0xff]
    %v282 = vld [vmem:[#allocation6 + $0x548] sm:$0xff]
    %v283 = vld [vmem:[#allocation6 + $0x550] sm:$0xff]
    %v284 = vld [vmem:[#allocation6 + $0x558] sm:$0xff]
    %v285 = vld [vmem:[#allocation6 + $0x560] sm:$0xff]
    %v286 = vld [vmem:[#allocation6 + $0x568] sm:$0xff]
    %v287 = vld [vmem:[#allocation6 + $0x570] sm:$0xff]
    %v288 = vld [vmem:[#allocation6 + $0x578] sm:$0xff]
    %v289 = vld [vmem:[#allocation6 + $0x580] sm:$0xff]
    %v290 = vld [vmem:[#allocation6 + $0x588] sm:$0xff]
    %v291 = vld [vmem:[#allocation6 + $0x590] sm:$0xff]
    %v292 = vld [vmem:[#allocation6 + $0x598] sm:$0xff]
    %v293 = vld [vmem:[#allocation6 + $0x5a0] sm:$0xff]
    %v294 = vld [vmem:[#allocation6 + $0x5a8] sm:$0xff]
    %v295 = vld [vmem:[#allocation6 + $0x5b0] sm:$0xff]
    %v296 = vld [vmem:[#allocation6 + $0x5b8] sm:$0xff]
    %v297 = vld [vmem:[#allocation6 + $0x5c0] sm:$0xff]
    %v298 = vld [vmem:[#allocation6 + $0x5c8] sm:$0xff]
    %v299 = vld [vmem:[#allocation6 + $0x5d0] sm:$0xff]
    %v300 = vld [vmem:[#allocation6 + $0x5d8] sm:$0xff]
    %v301 = vld [vmem:[#allocation6 + $0x5e0] sm:$0xff]
    %v302 = vld [vmem:[#allocation6 + $0x5e8] sm:$0xff]
    %v303 = vld [vmem:[#allocation6 + $0x5f0] sm:$0xff]
    %v304 = vld [vmem:[#allocation6 + $0x5f8] sm:$0xff]
    %v305 = vld [vmem:[#allocation4] sm:$0xff]
    %v306 = vld [vmem:[#allocation4 + $0x8] sm:$0xff]
    %v307 = vld [vmem:[#allocation4 + $0x10] sm:$0xff]
    %v308 = vld [vmem:[#allocation4 + $0x18] sm:$0xff]
    %v309 = vpack.c.bf16 %v307, %v305
    %v310 = vpack.c.bf16 %v308, %v306
    %v311 = vld [vmem:[#allocation7] sm:$0xff]
    %v312 = vld [vmem:[#allocation7 + $0x8] sm:$0xff]
    %v313 = vld [vmem:[#allocation7 + $0x10] sm:$0xff]
    %v314 = vld [vmem:[#allocation7 + $0x18] sm:$0xff]
    %v315 = vld [vmem:[#allocation7 + $0x20] sm:$0xff]
    %v316 = vld [vmem:[#allocation7 + $0x28] sm:$0xff]
    %v317 = vld [vmem:[#allocation7 + $0x30] sm:$0xff]
    %v318 = vld [vmem:[#allocation7 + $0x38] sm:$0xff]
    %v319 = vld [vmem:[#allocation7 + $0x40] sm:$0xff]
    %v320 = vld [vmem:[#allocation7 + $0x48] sm:$0xff]
    %v321 = vld [vmem:[#allocation7 + $0x50] sm:$0xff]
    %v322 = vld [vmem:[#allocation7 + $0x58] sm:$0xff]
    %v323 = vld [vmem:[#allocation7 + $0x60] sm:$0xff]
    %v324 = vld [vmem:[#allocation7 + $0x68] sm:$0xff]
    %v325 = vld [vmem:[#allocation7 + $0x70] sm:$0xff]
    %v326 = vld [vmem:[#allocation7 + $0x78] sm:$0xff]
    %v327 = vld [vmem:[#allocation7 + $0x80] sm:$0xff]
    %v328 = vld [vmem:[#allocation7 + $0x88] sm:$0xff]
    %v329 = vld [vmem:[#allocation7 + $0x90] sm:$0xff]
    %v330 = vld [vmem:[#allocation7 + $0x98] sm:$0xff]
    %v331 = vld [vmem:[#allocation7 + $0xa0] sm:$0xff]
    %v332 = vld [vmem:[#allocation7 + $0xa8] sm:$0xff]
    %v333 = vld [vmem:[#allocation7 + $0xb0] sm:$0xff]
    %v334 = vld [vmem:[#allocation7 + $0xb8] sm:$0xff]
    %v335 = vld [vmem:[#allocation7 + $0xc0] sm:$0xff]
    %v336 = vld [vmem:[#allocation7 + $0xc8] sm:$0xff]
    %v337 = vld [vmem:[#allocation7 + $0xd0] sm:$0xff]
    %v338 = vld [vmem:[#allocation7 + $0xd8] sm:$0xff]
    %v339 = vld [vmem:[#allocation7 + $0xe0] sm:$0xff]
    %v340 = vld [vmem:[#allocation7 + $0xe8] sm:$0xff]
    %v341 = vld [vmem:[#allocation7 + $0xf0] sm:$0xff]
    %v342 = vld [vmem:[#allocation7 + $0xf8] sm:$0xff]
    %v343 = vld [vmem:[#allocation7 + $0x100] sm:$0xff]
    %v344 = vld [vmem:[#allocation7 + $0x108] sm:$0xff]
    %v345 = vld [vmem:[#allocation7 + $0x110] sm:$0xff]
    %v346 = vld [vmem:[#allocation7 + $0x118] sm:$0xff]
    %v347 = vld [vmem:[#allocation7 + $0x120] sm:$0xff]
    %v348 = vld [vmem:[#allocation7 + $0x128] sm:$0xff]
    %v349 = vld [vmem:[#allocation7 + $0x130] sm:$0xff]
    %v350 = vld [vmem:[#allocation7 + $0x138] sm:$0xff]
    %v351 = vld [vmem:[#allocation7 + $0x140] sm:$0xff]
    %v352 = vld [vmem:[#allocation7 + $0x148] sm:$0xff]
    %v353 = vld [vmem:[#allocation7 + $0x150] sm:$0xff]
    %v354 = vld [vmem:[#allocation7 + $0x158] sm:$0xff]
    %v355 = vld [vmem:[#allocation7 + $0x160] sm:$0xff]
    %v356 = vld [vmem:[#allocation7 + $0x168] sm:$0xff]
    %v357 = vld [vmem:[#allocation7 + $0x170] sm:$0xff]
    %v358 = vld [vmem:[#allocation7 + $0x178] sm:$0xff]
    %v359 = vld [vmem:[#allocation7 + $0x180] sm:$0xff]
    %v360 = vld [vmem:[#allocation7 + $0x188] sm:$0xff]
    %v361 = vld [vmem:[#allocation7 + $0x190] sm:$0xff]
    %v362 = vld [vmem:[#allocation7 + $0x198] sm:$0xff]
    %v363 = vld [vmem:[#allocation7 + $0x1a0] sm:$0xff]
    %v364 = vld [vmem:[#allocation7 + $0x1a8] sm:$0xff]
    %v365 = vld [vmem:[#allocation7 + $0x1b0] sm:$0xff]
    %v366 = vld [vmem:[#allocation7 + $0x1b8] sm:$0xff]
    %v367 = vld [vmem:[#allocation7 + $0x1c0] sm:$0xff]
    %v368 = vld [vmem:[#allocation7 + $0x1c8] sm:$0xff]
    %v369 = vld [vmem:[#allocation7 + $0x1d0] sm:$0xff]
    %v370 = vld [vmem:[#allocation7 + $0x1d8] sm:$0xff]
    %v371 = vld [vmem:[#allocation7 + $0x1e0] sm:$0xff]
    %v372 = vld [vmem:[#allocation7 + $0x1e8] sm:$0xff]
    %v373 = vld [vmem:[#allocation7 + $0x1f0] sm:$0xff]
    %v374 = vld [vmem:[#allocation7 + $0x1f8] sm:$0xff]
    %v439 = vunpack.c.l.b16 %v311
    %v440 = vunpack.c.h.b16 %v311
    %v441 = vunpack.c.l.b16 %v312
    %v442 = vunpack.c.h.b16 %v312
    %v443 = vunpack.c.l.b16 %v313
    %v444 = vunpack.c.h.b16 %v313
    %v445 = vunpack.c.l.b16 %v314
    %v446 = vunpack.c.h.b16 %v314
    %v447 = vunpack.c.l.b16 %v315
    %v448 = vunpack.c.h.b16 %v315
    %v449 = vunpack.c.l.b16 %v316
    %v450 = vunpack.c.h.b16 %v316
    %v451 = vunpack.c.l.b16 %v317
    %v452 = vunpack.c.h.b16 %v317
    %v453 = vunpack.c.l.b16 %v318
    %v454 = vunpack.c.h.b16 %v318
    %v455 = vunpack.c.l.b16 %v319
    %v456 = vunpack.c.h.b16 %v319
    %v457 = vunpack.c.l.b16 %v320
    %v458 = vunpack.c.h.b16 %v320
    %v459 = vunpack.c.l.b16 %v321
    %v460 = vunpack.c.h.b16 %v321
    %v461 = vunpack.c.l.b16 %v322
    %v462 = vunpack.c.h.b16 %v322
    %v463 = vunpack.c.l.b16 %v323
    %v464 = vunpack.c.h.b16 %v323
    %v465 = vunpack.c.l.b16 %v324
    %v466 = vunpack.c.h.b16 %v324
    %v467 = vunpack.c.l.b16 %v325
    %v468 = vunpack.c.h.b16 %v325
    %v469 = vunpack.c.l.b16 %v326
    %v470 = vunpack.c.h.b16 %v326
    %v471 = vunpack.c.l.b16 %v327
    %v472 = vunpack.c.h.b16 %v327
    %v473 = vunpack.c.l.b16 %v328
    %v474 = vunpack.c.h.b16 %v328
    %v475 = vunpack.c.l.b16 %v329
    %v476 = vunpack.c.h.b16 %v329
    %v477 = vunpack.c.l.b16 %v330
    %v478 = vunpack.c.h.b16 %v330
    %v479 = vunpack.c.l.b16 %v331
    %v480 = vunpack.c.h.b16 %v331
    %v481 = vunpack.c.l.b16 %v332
    %v482 = vunpack.c.h.b16 %v332
    %v483 = vunpack.c.l.b16 %v333
    %v484 = vunpack.c.h.b16 %v333
    %v485 = vunpack.c.l.b16 %v334
    %v486 = vunpack.c.h.b16 %v334
    %v487 = vunpack.c.l.b16 %v335
    %v488 = vunpack.c.h.b16 %v335
    %v489 = vunpack.c.l.b16 %v336
    %v490 = vunpack.c.h.b16 %v336
    %v491 = vunpack.c.l.b16 %v337
    %v492 = vunpack.c.h.b16 %v337
    %v493 = vunpack.c.l.b16 %v338
    %v494 = vunpack.c.h.b16 %v338
    %v495 = vunpack.c.l.b16 %v339
    %v496 = vunpack.c.h.b16 %v339
    %v497 = vunpack.c.l.b16 %v340
    %v498 = vunpack.c.h.b16 %v340
    %v499 = vunpack.c.l.b16 %v341
    %v500 = vunpack.c.h.b16 %v341
    %v501 = vunpack.c.l.b16 %v342
    %v502 = vunpack.c.h.b16 %v342
    %v503 = vunpack.c.l.b16 %v343
    %v504 = vunpack.c.h.b16 %v343
    %v505 = vunpack.c.l.b16 %v344
    %v506 = vunpack.c.h.b16 %v344
    %v507 = vunpack.c.l.b16 %v345
    %v508 = vunpack.c.h.b16 %v345
    %v509 = vunpack.c.l.b16 %v346
    %v510 = vunpack.c.h.b16 %v346
    %v511 = vunpack.c.l.b16 %v347
    %v512 = vunpack.c.h.b16 %v347
    %v513 = vunpack.c.l.b16 %v348
    %v514 = vunpack.c.h.b16 %v348
    %v515 = vunpack.c.l.b16 %v349
    %v516 = vunpack.c.h.b16 %v349
    %v517 = vunpack.c.l.b16 %v350
    %v518 = vunpack.c.h.b16 %v350
    %v519 = vunpack.c.l.b16 %v351
    %v520 = vunpack.c.h.b16 %v351
    %v521 = vunpack.c.l.b16 %v352
    %v522 = vunpack.c.h.b16 %v352
    %v523 = vunpack.c.l.b16 %v353
    %v524 = vunpack.c.h.b16 %v353
    %v525 = vunpack.c.l.b16 %v354
    %v526 = vunpack.c.h.b16 %v354
    %v527 = vunpack.c.l.b16 %v355
    %v528 = vunpack.c.h.b16 %v355
    %v529 = vunpack.c.l.b16 %v356
    %v530 = vunpack.c.h.b16 %v356
    %v531 = vunpack.c.l.b16 %v357
    %v532 = vunpack.c.h.b16 %v357
    %v533 = vunpack.c.l.b16 %v358
    %v534 = vunpack.c.h.b16 %v358
    %v535 = vunpack.c.l.b16 %v359
    %v536 = vunpack.c.h.b16 %v359
    %v537 = vunpack.c.l.b16 %v360
    %v538 = vunpack.c.h.b16 %v360
    %v539 = vunpack.c.l.b16 %v361
    %v540 = vunpack.c.h.b16 %v361
    %v541 = vunpack.c.l.b16 %v362
    %v542 = vunpack.c.h.b16 %v362
    %v543 = vunpack.c.l.b16 %v363
    %v544 = vunpack.c.h.b16 %v363
    %v545 = vunpack.c.l.b16 %v364
    %v546 = vunpack.c.h.b16 %v364
    %v547 = vunpack.c.l.b16 %v365
    %v548 = vunpack.c.h.b16 %v365
    %v549 = vunpack.c.l.b16 %v366
    %v550 = vunpack.c.h.b16 %v366
    %v551 = vunpack.c.l.b16 %v367
    %v552 = vunpack.c.h.b16 %v367
    %v553 = vunpack.c.l.b16 %v368
    %v554 = vunpack.c.h.b16 %v368
    %v555 = vunpack.c.l.b16 %v369
    %v556 = vunpack.c.h.b16 %v369
    %v557 = vunpack.c.l.b16 %v370
    %v558 = vunpack.c.h.b16 %v370
    %v559 = vunpack.c.l.b16 %v371
    %v560 = vunpack.c.h.b16 %v371
    %v561 = vunpack.c.l.b16 %v372
    %v562 = vunpack.c.h.b16 %v372
    %v563 = vunpack.c.l.b16 %v373
    %v564 = vunpack.c.h.b16 %v373
    %v565 = vunpack.c.l.b16 %v374
    %v566 = vunpack.c.h.b16 %v374
    %v567 = vpack.c.b16 %v443, %v439
    %v568 = vpack.c.b16 %v444, %v440
    %v569 = vpack.c.b16 %v445, %v441
    %v570 = vpack.c.b16 %v446, %v442
    %v571 = vpack.c.b16 %v451, %v447
    %v572 = vpack.c.b16 %v452, %v448
    %v573 = vpack.c.b16 %v453, %v449
    %v574 = vpack.c.b16 %v454, %v450
    %v575 = vpack.c.b16 %v459, %v455
    %v576 = vpack.c.b16 %v460, %v456
    %v577 = vpack.c.b16 %v461, %v457
    %v578 = vpack.c.b16 %v462, %v458
    %v579 = vpack.c.b16 %v467, %v463
    %v580 = vpack.c.b16 %v468, %v464
    %v581 = vpack.c.b16 %v469, %v465
    %v582 = vpack.c.b16 %v470, %v466
    %v583 = vpack.c.b16 %v475, %v471
    %v584 = vpack.c.b16 %v476, %v472
    %v585 = vpack.c.b16 %v477, %v473
    %v586 = vpack.c.b16 %v478, %v474
    %v587 = vpack.c.b16 %v483, %v479
    %v588 = vpack.c.b16 %v484, %v480
    %v589 = vpack.c.b16 %v485, %v481
    %v590 = vpack.c.b16 %v486, %v482
    %v591 = vpack.c.b16 %v491, %v487
    %v592 = vpack.c.b16 %v492, %v488
    %v593 = vpack.c.b16 %v493, %v489
    %v594 = vpack.c.b16 %v494, %v490
    %v595 = vpack.c.b16 %v499, %v495
    %v596 = vpack.c.b16 %v500, %v496
    %v597 = vpack.c.b16 %v501, %v497
    %v598 = vpack.c.b16 %v502, %v498
    %v599 = vpack.c.b16 %v507, %v503
    %v600 = vpack.c.b16 %v508, %v504
    %v601 = vpack.c.b16 %v509, %v505
    %v602 = vpack.c.b16 %v510, %v506
    %v603 = vpack.c.b16 %v515, %v511
    %v604 = vpack.c.b16 %v516, %v512
    %v605 = vpack.c.b16 %v517, %v513
    %v606 = vpack.c.b16 %v518, %v514
    %v607 = vpack.c.b16 %v523, %v519
    %v608 = vpack.c.b16 %v524, %v520
    %v609 = vpack.c.b16 %v525, %v521
    %v610 = vpack.c.b16 %v526, %v522
    %v611 = vpack.c.b16 %v531, %v527
    %v612 = vpack.c.b16 %v532, %v528
    %v613 = vpack.c.b16 %v533, %v529
    %v614 = vpack.c.b16 %v534, %v530
    %v615 = vpack.c.b16 %v539, %v535
    %v616 = vpack.c.b16 %v540, %v536
    %v617 = vpack.c.b16 %v541, %v537
    %v618 = vpack.c.b16 %v542, %v538
    %v619 = vpack.c.b16 %v547, %v543
    %v620 = vpack.c.b16 %v548, %v544
    %v621 = vpack.c.b16 %v549, %v545
    %v622 = vpack.c.b16 %v550, %v546
    %v623 = vpack.c.b16 %v555, %v551
    %v624 = vpack.c.b16 %v556, %v552
    %v625 = vpack.c.b16 %v557, %v553
    %v626 = vpack.c.b16 %v558, %v554
    %v627 = vpack.c.b16 %v563, %v559
    %v628 = vpack.c.b16 %v564, %v560
    %v629 = vpack.c.b16 %v565, %v561
    %v630 = vpack.c.b16 %v566, %v562
    %695 = vmatprep.subr.bf16.mxu0 %v568
    %696 = vmatpush1.bf16.msra.mxu0 %v567
    %697 = vmatprep.subr.bf16.mxu0 %v572
    %698 = vmatpush1.bf16.msra.mxu0 %v571
    %699 = vmatprep.subr.bf16.mxu0 %v576
    %700 = vmatpush1.bf16.msra.mxu0 %v575
    %701 = vmatprep.subr.bf16.mxu0 %v580
    %702 = vmatpush1.bf16.msra.mxu0 %v579
    %703 = vmatprep.subr.bf16.mxu0 %v584
    %704 = vmatpush1.bf16.msra.mxu0 %v583
    %705 = vmatprep.subr.bf16.mxu0 %v588
    %706 = vmatpush1.bf16.msra.mxu0 %v587
    %707 = vmatprep.subr.bf16.mxu0 %v592
    %708 = vmatpush1.bf16.msra.mxu0 %v591
    %709 = vmatprep.subr.bf16.mxu0 %v596
    %710 = vmatpush1.bf16.msra.mxu0 %v595
    %711 = vmatprep.subr.bf16.mxu0 %v600
    %712 = vmatpush1.bf16.msra.mxu0 %v599
    %713 = vmatprep.subr.bf16.mxu0 %v604
    %714 = vmatpush1.bf16.msra.mxu0 %v603
    %715 = vmatprep.subr.bf16.mxu0 %v608
    %716 = vmatpush1.bf16.msra.mxu0 %v607
    %717 = vmatprep.subr.bf16.mxu0 %v612
    %718 = vmatpush1.bf16.msra.mxu0 %v611
    %719 = vmatprep.subr.bf16.mxu0 %v616
    %720 = vmatpush1.bf16.msra.mxu0 %v615
    %721 = vmatprep.subr.bf16.mxu0 %v620
    %722 = vmatpush1.bf16.msra.mxu0 %v619
    %723 = vmatprep.subr.bf16.mxu0 %v624
    %724 = vmatpush1.bf16.msra.mxu0 %v623
    %725 = vmatprep.subr.bf16.mxu0 %v628
    %726 = vmatpush1.bf16.msra.mxu0 %v627
    %727 = vmatprep.mubr.bf16.mxu0 %v310
    %728 = vmatmul.mubr.bf16.gmra.mrb[0].mxu0 %v309
    %v729 = vpop.f32.mrb[0].mxu0
    %v730 = vadd.f32 0.0, %v729
    %v731 = vpop.f32.mrb[0].mxu0
    %v732 = vadd.f32 0.0, %v731
    %v733 = vpop.f32.mrb[0].mxu0
    %v734 = vadd.f32 0.0, %v733
    %v735 = vpop.f32.mrb[0].mxu0
    %v736 = vadd.f32 0.0, %v735
    %737 = vdwg.mxu0
    %738 = vmatprep.subr.bf16.mxu0 %v570
    %739 = vmatpush1.bf16.msra.mxu0 %v569
    %740 = vmatprep.subr.bf16.mxu0 %v574
    %741 = vmatpush1.bf16.msra.mxu0 %v573
    %742 = vmatprep.subr.bf16.mxu0 %v578
    %743 = vmatpush1.bf16.msra.mxu0 %v577
    %744 = vmatprep.subr.bf16.mxu0 %v582
    %745 = vmatpush1.bf16.msra.mxu0 %v581
    %746 = vmatprep.subr.bf16.mxu0 %v586
    %747 = vmatpush1.bf16.msra.mxu0 %v585
    %748 = vmatprep.subr.bf16.mxu0 %v590
    %749 = vmatpush1.bf16.msra.mxu0 %v589
    %750 = vmatprep.subr.bf16.mxu0 %v594
    %751 = vmatpush1.bf16.msra.mxu0 %v593
    %752 = vmatprep.subr.bf16.mxu0 %v598
    %753 = vmatpush1.bf16.msra.mxu0 %v597
    %754 = vmatprep.subr.bf16.mxu0 %v602
    %755 = vmatpush1.bf16.msra.mxu0 %v601
    %756 = vmatprep.subr.bf16.mxu0 %v606
    %757 = vmatpush1.bf16.msra.mxu0 %v605
    %758 = vmatprep.subr.bf16.mxu0 %v610
    %759 = vmatpush1.bf16.msra.mxu0 %v609
    %760 = vmatprep.subr.bf16.mxu0 %v614
    %761 = vmatpush1.bf16.msra.mxu0 %v613
    %762 = vmatprep.subr.bf16.mxu0 %v618
    %763 = vmatpush1.bf16.msra.mxu0 %v617
    %764 = vmatprep.subr.bf16.mxu0 %v622
    %765 = vmatpush1.bf16.msra.mxu0 %v621
    %766 = vmatprep.subr.bf16.mxu0 %v626
    %767 = vmatpush1.bf16.msra.mxu0 %v625
    %768 = vmatprep.subr.bf16.mxu0 %v630
    %769 = vmatpush1.bf16.msra.mxu0 %v629
    %770 = vmatprep.mubr.bf16.mxu0 %v310
    %771 = vmatmul.mubr.bf16.gmra.mrb[0].mxu0 %v309
    %v772 = vpop.f32.mrb[0].mxu0
    %v773 = vadd.f32 0.0, %v772
    %v774 = vpop.f32.mrb[0].mxu0
    %v775 = vadd.f32 0.0, %v774
    %v776 = vpop.f32.mrb[0].mxu0
    %v777 = vadd.f32 0.0, %v776
    %v778 = vpop.f32.mrb[0].mxu0
    %v779 = vadd.f32 0.0, %v778
    %780 = vdwg.mxu0
    %v973 = vunpack.c.l.b16 %v113
    %v974 = vunpack.c.h.b16 %v113
    %v975 = vunpack.c.l.b16 %v114
    %v976 = vunpack.c.h.b16 %v114
    %v977 = vunpack.c.l.b16 %v115
    %v978 = vunpack.c.h.b16 %v115
    %v979 = vunpack.c.l.b16 %v116
    %v980 = vunpack.c.h.b16 %v116
    %v981 = vunpack.c.l.b16 %v117
    %v982 = vunpack.c.h.b16 %v117
    %v983 = vunpack.c.l.b16 %v118
    %v984 = vunpack.c.h.b16 %v118
    %v985 = vunpack.c.l.b16 %v119
    %v986 = vunpack.c.h.b16 %v119
    %v987 = vunpack.c.l.b16 %v120
    %v988 = vunpack.c.h.b16 %v120
    %v989 = vunpack.c.l.b16 %v121
    %v990 = vunpack.c.h.b16 %v121
    %v991 = vunpack.c.l.b16 %v122
    %v992 = vunpack.c.h.b16 %v122
    %v993 = vunpack.c.l.b16 %v123
    %v994 = vunpack.c.h.b16 %v123
    %v995 = vunpack.c.l.b16 %v124
    %v996 = vunpack.c.h.b16 %v124
    %v997 = vunpack.c.l.b16 %v125
    %v998 = vunpack.c.h.b16 %v125
    %v999 = vunpack.c.l.b16 %v126
    %v1000 = vunpack.c.h.b16 %v126
    %v1001 = vunpack.c.l.b16 %v127
    %v1002 = vunpack.c.h.b16 %v127
    %v1003 = vunpack.c.l.b16 %v128
    %v1004 = vunpack.c.h.b16 %v128
    %v1005 = vunpack.c.l.b16 %v129
    %v1006 = vunpack.c.h.b16 %v129
    %v1007 = vunpack.c.l.b16 %v130
    %v1008 = vunpack.c.h.b16 %v130
    %v1009 = vunpack.c.l.b16 %v131
    %v1010 = vunpack.c.h.b16 %v131
    %v1011 = vunpack.c.l.b16 %v132
    %v1012 = vunpack.c.h.b16 %v132
    %v1013 = vunpack.c.l.b16 %v133
    %v1014 = vunpack.c.h.b16 %v133
    %v1015 = vunpack.c.l.b16 %v134
    %v1016 = vunpack.c.h.b16 %v134
    %v1017 = vunpack.c.l.b16 %v135
    %v1018 = vunpack.c.h.b16 %v135
    %v1019 = vunpack.c.l.b16 %v136
    %v1020 = vunpack.c.h.b16 %v136
    %v1021 = vunpack.c.l.b16 %v137
    %v1022 = vunpack.c.h.b16 %v137
    %v1023 = vunpack.c.l.b16 %v138
    %v1024 = vunpack.c.h.b16 %v138
    %v1025 = vunpack.c.l.b16 %v139
    %v1026 = vunpack.c.h.b16 %v139
    %v1027 = vunpack.c.l.b16 %v140
    %v1028 = vunpack.c.h.b16 %v140
    %v1029 = vunpack.c.l.b16 %v141
    %v1030 = vunpack.c.h.b16 %v141
    %v1031 = vunpack.c.l.b16 %v142
    %v1032 = vunpack.c.h.b16 %v142
    %v1033 = vunpack.c.l.b16 %v143
    %v1034 = vunpack.c.h.b16 %v143
    %v1035 = vunpack.c.l.b16 %v144
    %v1036 = vunpack.c.h.b16 %v144
    %v1037 = vunpack.c.l.b16 %v145
    %v1038 = vunpack.c.h.b16 %v145
    %v1039 = vunpack.c.l.b16 %v146
    %v1040 = vunpack.c.h.b16 %v146
    %v1041 = vunpack.c.l.b16 %v147
    %v1042 = vunpack.c.h.b16 %v147
    %v1043 = vunpack.c.l.b16 %v148
    %v1044 = vunpack.c.h.b16 %v148
    %v1045 = vunpack.c.l.b16 %v149
    %v1046 = vunpack.c.h.b16 %v149
    %v1047 = vunpack.c.l.b16 %v150
    %v1048 = vunpack.c.h.b16 %v150
    %v1049 = vunpack.c.l.b16 %v151
    %v1050 = vunpack.c.h.b16 %v151
    %v1051 = vunpack.c.l.b16 %v152
    %v1052 = vunpack.c.h.b16 %v152
    %v1053 = vunpack.c.l.b16 %v153
    %v1054 = vunpack.c.h.b16 %v153
    %v1055 = vunpack.c.l.b16 %v154
    %v1056 = vunpack.c.h.b16 %v154
    %v1057 = vunpack.c.l.b16 %v155
    %v1058 = vunpack.c.h.b16 %v155
    %v1059 = vunpack.c.l.b16 %v156
    %v1060 = vunpack.c.h.b16 %v156
    %v1061 = vunpack.c.l.b16 %v157
    %v1062 = vunpack.c.h.b16 %v157
    %v1063 = vunpack.c.l.b16 %v158
    %v1064 = vunpack.c.h.b16 %v158
    %v1065 = vunpack.c.l.b16 %v159
    %v1066 = vunpack.c.h.b16 %v159
    %v1067 = vunpack.c.l.b16 %v160
    %v1068 = vunpack.c.h.b16 %v160
    %v1069 = vunpack.c.l.b16 %v161
    %v1070 = vunpack.c.h.b16 %v161
    %v1071 = vunpack.c.l.b16 %v162
    %v1072 = vunpack.c.h.b16 %v162
    %v1073 = vunpack.c.l.b16 %v163
    %v1074 = vunpack.c.h.b16 %v163
    %v1075 = vunpack.c.l.b16 %v164
    %v1076 = vunpack.c.h.b16 %v164
    %v1077 = vunpack.c.l.b16 %v165
    %v1078 = vunpack.c.h.b16 %v165
    %v1079 = vunpack.c.l.b16 %v166
    %v1080 = vunpack.c.h.b16 %v166
    %v1081 = vunpack.c.l.b16 %v167
    %v1082 = vunpack.c.h.b16 %v167
    %v1083 = vunpack.c.l.b16 %v168
    %v1084 = vunpack.c.h.b16 %v168
    %v1085 = vunpack.c.l.b16 %v169
    %v1086 = vunpack.c.h.b16 %v169
    %v1087 = vunpack.c.l.b16 %v170
    %v1088 = vunpack.c.h.b16 %v170
    %v1089 = vunpack.c.l.b16 %v171
    %v1090 = vunpack.c.h.b16 %v171
    %v1091 = vunpack.c.l.b16 %v172
    %v1092 = vunpack.c.h.b16 %v172
    %v1093 = vunpack.c.l.b16 %v173
    %v1094 = vunpack.c.h.b16 %v173
    %v1095 = vunpack.c.l.b16 %v174
    %v1096 = vunpack.c.h.b16 %v174
    %v1097 = vunpack.c.l.b16 %v175
    %v1098 = vunpack.c.h.b16 %v175
    %v1099 = vunpack.c.l.b16 %v176
    %v1100 = vunpack.c.h.b16 %v176
    %v1101 = vunpack.c.l.b16 %v177
    %v1102 = vunpack.c.h.b16 %v177
    %v1103 = vunpack.c.l.b16 %v178
    %v1104 = vunpack.c.h.b16 %v178
    %v1105 = vunpack.c.l.b16 %v179
    %v1106 = vunpack.c.h.b16 %v179
    %v1107 = vunpack.c.l.b16 %v180
    %v1108 = vunpack.c.h.b16 %v180
    %v1109 = vunpack.c.l.b16 %v181
    %v1110 = vunpack.c.h.b16 %v181
    %v1111 = vunpack.c.l.b16 %v182
    %v1112 = vunpack.c.h.b16 %v182
    %v1113 = vunpack.c.l.b16 %v183
    %v1114 = vunpack.c.h.b16 %v183
    %v1115 = vunpack.c.l.b16 %v184
    %v1116 = vunpack.c.h.b16 %v184
    %v1117 = vunpack.c.l.b16 %v185
    %v1118 = vunpack.c.h.b16 %v185
    %v1119 = vunpack.c.l.b16 %v186
    %v1120 = vunpack.c.h.b16 %v186
    %v1121 = vunpack.c.l.b16 %v187
    %v1122 = vunpack.c.h.b16 %v187
    %v1123 = vunpack.c.l.b16 %v188
    %v1124 = vunpack.c.h.b16 %v188
    %v1125 = vunpack.c.l.b16 %v189
    %v1126 = vunpack.c.h.b16 %v189
    %v1127 = vunpack.c.l.b16 %v190
    %v1128 = vunpack.c.h.b16 %v190
    %v1129 = vunpack.c.l.b16 %v191
    %v1130 = vunpack.c.h.b16 %v191
    %v1131 = vunpack.c.l.b16 %v192
    %v1132 = vunpack.c.h.b16 %v192
    %v1133 = vunpack.c.l.b16 %v193
    %v1134 = vunpack.c.h.b16 %v193
    %v1135 = vunpack.c.l.b16 %v194
    %v1136 = vunpack.c.h.b16 %v194
    %v1137 = vunpack.c.l.b16 %v195
    %v1138 = vunpack.c.h.b16 %v195
    %v1139 = vunpack.c.l.b16 %v196
    %v1140 = vunpack.c.h.b16 %v196
    %v1141 = vunpack.c.l.b16 %v197
    %v1142 = vunpack.c.h.b16 %v197
    %v1143 = vunpack.c.l.b16 %v198
    %v1144 = vunpack.c.h.b16 %v198
    %v1145 = vunpack.c.l.b16 %v199
    %v1146 = vunpack.c.h.b16 %v199
    %v1147 = vunpack.c.l.b16 %v200
    %v1148 = vunpack.c.h.b16 %v200
    %v1149 = vunpack.c.l.b16 %v201
    %v1150 = vunpack.c.h.b16 %v201
    %v1151 = vunpack.c.l.b16 %v202
    %v1152 = vunpack.c.h.b16 %v202
    %v1153 = vunpack.c.l.b16 %v203
    %v1154 = vunpack.c.h.b16 %v203
    %v1155 = vunpack.c.l.b16 %v204
    %v1156 = vunpack.c.h.b16 %v204
    %v1157 = vunpack.c.l.b16 %v205
    %v1158 = vunpack.c.h.b16 %v205
    %v1159 = vunpack.c.l.b16 %v206
    %v1160 = vunpack.c.h.b16 %v206
    %v1161 = vunpack.c.l.b16 %v207
    %v1162 = vunpack.c.h.b16 %v207
    %v1163 = vunpack.c.l.b16 %v208
    %v1164 = vunpack.c.h.b16 %v208
    %v1165 = vunpack.c.l.b16 %v209
    %v1166 = vunpack.c.h.b16 %v209
    %v1167 = vunpack.c.l.b16 %v210
    %v1168 = vunpack.c.h.b16 %v210
    %v1169 = vunpack.c.l.b16 %v211
    %v1170 = vunpack.c.h.b16 %v211
    %v1171 = vunpack.c.l.b16 %v212
    %v1172 = vunpack.c.h.b16 %v212
    %v1173 = vunpack.c.l.b16 %v213
    %v1174 = vunpack.c.h.b16 %v213
    %v1175 = vunpack.c.l.b16 %v214
    %v1176 = vunpack.c.h.b16 %v214
    %v1177 = vunpack.c.l.b16 %v215
    %v1178 = vunpack.c.h.b16 %v215
    %v1179 = vunpack.c.l.b16 %v216
    %v1180 = vunpack.c.h.b16 %v216
    %v1181 = vunpack.c.l.b16 %v217
    %v1182 = vunpack.c.h.b16 %v217
    %v1183 = vunpack.c.l.b16 %v218
    %v1184 = vunpack.c.h.b16 %v218
    %v1185 = vunpack.c.l.b16 %v219
    %v1186 = vunpack.c.h.b16 %v219
    %v1187 = vunpack.c.l.b16 %v220
    %v1188 = vunpack.c.h.b16 %v220
    %v1189 = vunpack.c.l.b16 %v221
    %v1190 = vunpack.c.h.b16 %v221
    %v1191 = vunpack.c.l.b16 %v222
    %v1192 = vunpack.c.h.b16 %v222
    %v1193 = vunpack.c.l.b16 %v223
    %v1194 = vunpack.c.h.b16 %v223
    %v1195 = vunpack.c.l.b16 %v224
    %v1196 = vunpack.c.h.b16 %v224
    %v1197 = vunpack.c.l.b16 %v225
    %v1198 = vunpack.c.h.b16 %v225
    %v1199 = vunpack.c.l.b16 %v226
    %v1200 = vunpack.c.h.b16 %v226
    %v1201 = vunpack.c.l.b16 %v227
    %v1202 = vunpack.c.h.b16 %v227
    %v1203 = vunpack.c.l.b16 %v228
    %v1204 = vunpack.c.h.b16 %v228
    %v1205 = vunpack.c.l.b16 %v229
    %v1206 = vunpack.c.h.b16 %v229
    %v1207 = vunpack.c.l.b16 %v230
    %v1208 = vunpack.c.h.b16 %v230
    %v1209 = vunpack.c.l.b16 %v231
    %v1210 = vunpack.c.h.b16 %v231
    %v1211 = vunpack.c.l.b16 %v232
    %v1212 = vunpack.c.h.b16 %v232
    %v1213 = vunpack.c.l.b16 %v233
    %v1214 = vunpack.c.h.b16 %v233
    %v1215 = vunpack.c.l.b16 %v234
    %v1216 = vunpack.c.h.b16 %v234
    %v1217 = vunpack.c.l.b16 %v235
    %v1218 = vunpack.c.h.b16 %v235
    %v1219 = vunpack.c.l.b16 %v236
    %v1220 = vunpack.c.h.b16 %v236
    %v1221 = vunpack.c.l.b16 %v237
    %v1222 = vunpack.c.h.b16 %v237
    %v1223 = vunpack.c.l.b16 %v238
    %v1224 = vunpack.c.h.b16 %v238
    %v1225 = vunpack.c.l.b16 %v239
    %v1226 = vunpack.c.h.b16 %v239
    %v1227 = vunpack.c.l.b16 %v240
    %v1228 = vunpack.c.h.b16 %v240
    %v1229 = vunpack.c.l.b16 %v241
    %v1230 = vunpack.c.h.b16 %v241
    %v1231 = vunpack.c.l.b16 %v242
    %v1232 = vunpack.c.h.b16 %v242
    %v1233 = vunpack.c.l.b16 %v243
    %v1234 = vunpack.c.h.b16 %v243
    %v1235 = vunpack.c.l.b16 %v244
    %v1236 = vunpack.c.h.b16 %v244
    %v1237 = vunpack.c.l.b16 %v245
    %v1238 = vunpack.c.h.b16 %v245
    %v1239 = vunpack.c.l.b16 %v246
    %v1240 = vunpack.c.h.b16 %v246
    %v1241 = vunpack.c.l.b16 %v247
    %v1242 = vunpack.c.h.b16 %v247
    %v1243 = vunpack.c.l.b16 %v248
    %v1244 = vunpack.c.h.b16 %v248
    %v1245 = vunpack.c.l.b16 %v249
    %v1246 = vunpack.c.h.b16 %v249
    %v1247 = vunpack.c.l.b16 %v250
    %v1248 = vunpack.c.h.b16 %v250
    %v1249 = vunpack.c.l.b16 %v251
    %v1250 = vunpack.c.h.b16 %v251
    %v1251 = vunpack.c.l.b16 %v252
    %v1252 = vunpack.c.h.b16 %v252
    %v1253 = vunpack.c.l.b16 %v253
    %v1254 = vunpack.c.h.b16 %v253
    %v1255 = vunpack.c.l.b16 %v254
    %v1256 = vunpack.c.h.b16 %v254
    %v1257 = vunpack.c.l.b16 %v255
    %v1258 = vunpack.c.h.b16 %v255
    %v1259 = vunpack.c.l.b16 %v256
    %v1260 = vunpack.c.h.b16 %v256
    %v1261 = vunpack.c.l.b16 %v257
    %v1262 = vunpack.c.h.b16 %v257
    %v1263 = vunpack.c.l.b16 %v258
    %v1264 = vunpack.c.h.b16 %v258
    %v1265 = vunpack.c.l.b16 %v259
    %v1266 = vunpack.c.h.b16 %v259
    %v1267 = vunpack.c.l.b16 %v260
    %v1268 = vunpack.c.h.b16 %v260
    %v1269 = vunpack.c.l.b16 %v261
    %v1270 = vunpack.c.h.b16 %v261
    %v1271 = vunpack.c.l.b16 %v262
    %v1272 = vunpack.c.h.b16 %v262
    %v1273 = vunpack.c.l.b16 %v263
    %v1274 = vunpack.c.h.b16 %v263
    %v1275 = vunpack.c.l.b16 %v264
    %v1276 = vunpack.c.h.b16 %v264
    %v1277 = vunpack.c.l.b16 %v265
    %v1278 = vunpack.c.h.b16 %v265
    %v1279 = vunpack.c.l.b16 %v266
    %v1280 = vunpack.c.h.b16 %v266
    %v1281 = vunpack.c.l.b16 %v267
    %v1282 = vunpack.c.h.b16 %v267
    %v1283 = vunpack.c.l.b16 %v268
    %v1284 = vunpack.c.h.b16 %v268
    %v1285 = vunpack.c.l.b16 %v269
    %v1286 = vunpack.c.h.b16 %v269
    %v1287 = vunpack.c.l.b16 %v270
    %v1288 = vunpack.c.h.b16 %v270
    %v1289 = vunpack.c.l.b16 %v271
    %v1290 = vunpack.c.h.b16 %v271
    %v1291 = vunpack.c.l.b16 %v272
    %v1292 = vunpack.c.h.b16 %v272
    %v1293 = vunpack.c.l.b16 %v273
    %v1294 = vunpack.c.h.b16 %v273
    %v1295 = vunpack.c.l.b16 %v274
    %v1296 = vunpack.c.h.b16 %v274
    %v1297 = vunpack.c.l.b16 %v275
    %v1298 = vunpack.c.h.b16 %v275
    %v1299 = vunpack.c.l.b16 %v276
    %v1300 = vunpack.c.h.b16 %v276
    %v1301 = vunpack.c.l.b16 %v277
    %v1302 = vunpack.c.h.b16 %v277
    %v1303 = vunpack.c.l.b16 %v278
    %v1304 = vunpack.c.h.b16 %v278
    %v1305 = vunpack.c.l.b16 %v279
    %v1306 = vunpack.c.h.b16 %v279
    %v1307 = vunpack.c.l.b16 %v280
    %v1308 = vunpack.c.h.b16 %v280
    %v1309 = vunpack.c.l.b16 %v281
    %v1310 = vunpack.c.h.b16 %v281
    %v1311 = vunpack.c.l.b16 %v282
    %v1312 = vunpack.c.h.b16 %v282
    %v1313 = vunpack.c.l.b16 %v283
    %v1314 = vunpack.c.h.b16 %v283
    %v1315 = vunpack.c.l.b16 %v284
    %v1316 = vunpack.c.h.b16 %v284
    %v1317 = vunpack.c.l.b16 %v285
    %v1318 = vunpack.c.h.b16 %v285
    %v1319 = vunpack.c.l.b16 %v286
    %v1320 = vunpack.c.h.b16 %v286
    %v1321 = vunpack.c.l.b16 %v287
    %v1322 = vunpack.c.h.b16 %v287
    %v1323 = vunpack.c.l.b16 %v288
    %v1324 = vunpack.c.h.b16 %v288
    %v1325 = vunpack.c.l.b16 %v289
    %v1326 = vunpack.c.h.b16 %v289
    %v1327 = vunpack.c.l.b16 %v290
    %v1328 = vunpack.c.h.b16 %v290
    %v1329 = vunpack.c.l.b16 %v291
    %v1330 = vunpack.c.h.b16 %v291
    %v1331 = vunpack.c.l.b16 %v292
    %v1332 = vunpack.c.h.b16 %v292
    %v1333 = vunpack.c.l.b16 %v293
    %v1334 = vunpack.c.h.b16 %v293
    %v1335 = vunpack.c.l.b16 %v294
    %v1336 = vunpack.c.h.b16 %v294
    %v1337 = vunpack.c.l.b16 %v295
    %v1338 = vunpack.c.h.b16 %v295
    %v1339 = vunpack.c.l.b16 %v296
    %v1340 = vunpack.c.h.b16 %v296
    %v1341 = vunpack.c.l.b16 %v297
    %v1342 = vunpack.c.h.b16 %v297
    %v1343 = vunpack.c.l.b16 %v298
    %v1344 = vunpack.c.h.b16 %v298
    %v1345 = vunpack.c.l.b16 %v299
    %v1346 = vunpack.c.h.b16 %v299
    %v1347 = vunpack.c.l.b16 %v300
    %v1348 = vunpack.c.h.b16 %v300
    %v1349 = vunpack.c.l.b16 %v301
    %v1350 = vunpack.c.h.b16 %v301
    %v1351 = vunpack.c.l.b16 %v302
    %v1352 = vunpack.c.h.b16 %v302
    %v1353 = vunpack.c.l.b16 %v303
    %v1354 = vunpack.c.h.b16 %v303
    %v1355 = vunpack.c.l.b16 %v304
    %v1356 = vunpack.c.h.b16 %v304
    %v1357 = vpack.c.b16 %v977, %v973
    %v1358 = vpack.c.b16 %v978, %v974
    %v1359 = vpack.c.b16 %v979, %v975
    %v1360 = vpack.c.b16 %v980, %v976
    %v1361 = vpack.c.b16 %v985, %v981
    %v1362 = vpack.c.b16 %v986, %v982
    %v1363 = vpack.c.b16 %v987, %v983
    %v1364 = vpack.c.b16 %v988, %v984
    %v1365 = vpack.c.b16 %v993, %v989
    %v1366 = vpack.c.b16 %v994, %v990
    %v1367 = vpack.c.b16 %v995, %v991
    %v1368 = vpack.c.b16 %v996, %v992
    %v1369 = vpack.c.b16 %v1001, %v997
    %v1370 = vpack.c.b16 %v1002, %v998
    %v1371 = vpack.c.b16 %v1003, %v999
    %v1372 = vpack.c.b16 %v1004, %v1000
    %v1373 = vpack.c.b16 %v1009, %v1005
    %v1374 = vpack.c.b16 %v1010, %v1006
    %v1375 = vpack.c.b16 %v1011, %v1007
    %v1376 = vpack.c.b16 %v1012, %v1008
    %v1377 = vpack.c.b16 %v1017, %v1013
    %v1378 = vpack.c.b16 %v1018, %v1014
    %v1379 = vpack.c.b16 %v1019, %v1015
    %v1380 = vpack.c.b16 %v1020, %v1016
    %v1381 = vpack.c.b16 %v1025, %v1021
    %v1382 = vpack.c.b16 %v1026, %v1022
    %v1383 = vpack.c.b16 %v1027, %v1023
    %v1384 = vpack.c.b16 %v1028, %v1024
    %v1385 = vpack.c.b16 %v1033, %v1029
    %v1386 = vpack.c.b16 %v1034, %v1030
    %v1387 = vpack.c.b16 %v1035, %v1031
    %v1388 = vpack.c.b16 %v1036, %v1032
    %v1389 = vpack.c.b16 %v1041, %v1037
    %v1390 = vpack.c.b16 %v1042, %v1038
    %v1391 = vpack.c.b16 %v1043, %v1039
    %v1392 = vpack.c.b16 %v1044, %v1040
    %v1393 = vpack.c.b16 %v1049, %v1045
    %v1394 = vpack.c.b16 %v1050, %v1046
    %v1395 = vpack.c.b16 %v1051, %v1047
    %v1396 = vpack.c.b16 %v1052, %v1048
    %v1397 = vpack.c.b16 %v1057, %v1053
    %v1398 = vpack.c.b16 %v1058, %v1054
    %v1399 = vpack.c.b16 %v1059, %v1055
    %v1400 = vpack.c.b16 %v1060, %v1056
    %v1401 = vpack.c.b16 %v1065, %v1061
    %v1402 = vpack.c.b16 %v1066, %v1062
    %v1403 = vpack.c.b16 %v1067, %v1063
    %v1404 = vpack.c.b16 %v1068, %v1064
    %v1405 = vpack.c.b16 %v1073, %v1069
    %v1406 = vpack.c.b16 %v1074, %v1070
    %v1407 = vpack.c.b16 %v1075, %v1071
    %v1408 = vpack.c.b16 %v1076, %v1072
    %v1409 = vpack.c.b16 %v1081, %v1077
    %v1410 = vpack.c.b16 %v1082, %v1078
    %v1411 = vpack.c.b16 %v1083, %v1079
    %v1412 = vpack.c.b16 %v1084, %v1080
    %v1413 = vpack.c.b16 %v1089, %v1085
    %v1414 = vpack.c.b16 %v1090, %v1086
    %v1415 = vpack.c.b16 %v1091, %v1087
    %v1416 = vpack.c.b16 %v1092, %v1088
    %v1417 = vpack.c.b16 %v1097, %v1093
    %v1418 = vpack.c.b16 %v1098, %v1094
    %v1419 = vpack.c.b16 %v1099, %v1095
    %v1420 = vpack.c.b16 %v1100, %v1096
    %v1421 = vpack.c.b16 %v1105, %v1101
    %v1422 = vpack.c.b16 %v1106, %v1102
    %v1423 = vpack.c.b16 %v1107, %v1103
    %v1424 = vpack.c.b16 %v1108, %v1104
    %v1425 = vpack.c.b16 %v1113, %v1109
    %v1426 = vpack.c.b16 %v1114, %v1110
    %v1427 = vpack.c.b16 %v1115, %v1111
    %v1428 = vpack.c.b16 %v1116, %v1112
    %v1429 = vpack.c.b16 %v1121, %v1117
    %v1430 = vpack.c.b16 %v1122, %v1118
    %v1431 = vpack.c.b16 %v1123, %v1119
    %v1432 = vpack.c.b16 %v1124, %v1120
    %v1433 = vpack.c.b16 %v1129, %v1125
    %v1434 = vpack.c.b16 %v1130, %v1126
    %v1435 = vpack.c.b16 %v1131, %v1127
    %v1436 = vpack.c.b16 %v1132, %v1128
    %v1437 = vpack.c.b16 %v1137, %v1133
    %v1438 = vpack.c.b16 %v1138, %v1134
    %v1439 = vpack.c.b16 %v1139, %v1135
    %v1440 = vpack.c.b16 %v1140, %v1136
    %v1441 = vpack.c.b16 %v1145, %v1141
    %v1442 = vpack.c.b16 %v1146, %v1142
    %v1443 = vpack.c.b16 %v1147, %v1143
    %v1444 = vpack.c.b16 %v1148, %v1144
    %v1445 = vpack.c.b16 %v1153, %v1149
    %v1446 = vpack.c.b16 %v1154, %v1150
    %v1447 = vpack.c.b16 %v1155, %v1151
    %v1448 = vpack.c.b16 %v1156, %v1152
    %v1449 = vpack.c.b16 %v1161, %v1157
    %v1450 = vpack.c.b16 %v1162, %v1158
    %v1451 = vpack.c.b16 %v1163, %v1159
    %v1452 = vpack.c.b16 %v1164, %v1160
    %v1453 = vpack.c.b16 %v1169, %v1165
    %v1454 = vpack.c.b16 %v1170, %v1166
    %v1455 = vpack.c.b16 %v1171, %v1167
    %v1456 = vpack.c.b16 %v1172, %v1168
    %v1457 = vpack.c.b16 %v1177, %v1173
    %v1458 = vpack.c.b16 %v1178, %v1174
    %v1459 = vpack.c.b16 %v1179, %v1175
    %v1460 = vpack.c.b16 %v1180, %v1176
    %v1461 = vpack.c.b16 %v1185, %v1181
    %v1462 = vpack.c.b16 %v1186, %v1182
    %v1463 = vpack.c.b16 %v1187, %v1183
    %v1464 = vpack.c.b16 %v1188, %v1184
    %v1465 = vpack.c.b16 %v1193, %v1189
    %v1466 = vpack.c.b16 %v1194, %v1190
    %v1467 = vpack.c.b16 %v1195, %v1191
    %v1468 = vpack.c.b16 %v1196, %v1192
    %v1469 = vpack.c.b16 %v1201, %v1197
    %v1470 = vpack.c.b16 %v1202, %v1198
    %v1471 = vpack.c.b16 %v1203, %v1199
    %v1472 = vpack.c.b16 %v1204, %v1200
    %v1473 = vpack.c.b16 %v1209, %v1205
    %v1474 = vpack.c.b16 %v1210, %v1206
    %v1475 = vpack.c.b16 %v1211, %v1207
    %v1476 = vpack.c.b16 %v1212, %v1208
    %v1477 = vpack.c.b16 %v1217, %v1213
    %v1478 = vpack.c.b16 %v1218, %v1214
    %v1479 = vpack.c.b16 %v1219, %v1215
    %v1480 = vpack.c.b16 %v1220, %v1216
    %v1481 = vpack.c.b16 %v1225, %v1221
    %v1482 = vpack.c.b16 %v1226, %v1222
    %v1483 = vpack.c.b16 %v1227, %v1223
    %v1484 = vpack.c.b16 %v1228, %v1224
    %v1485 = vpack.c.b16 %v1233, %v1229
    %v1486 = vpack.c.b16 %v1234, %v1230
    %v1487 = vpack.c.b16 %v1235, %v1231
    %v1488 = vpack.c.b16 %v1236, %v1232
    %v1489 = vpack.c.b16 %v1241, %v1237
    %v1490 = vpack.c.b16 %v1242, %v1238
    %v1491 = vpack.c.b16 %v1243, %v1239
    %v1492 = vpack.c.b16 %v1244, %v1240
    %v1493 = vpack.c.b16 %v1249, %v1245
    %v1494 = vpack.c.b16 %v1250, %v1246
    %v1495 = vpack.c.b16 %v1251, %v1247
    %v1496 = vpack.c.b16 %v1252, %v1248
    %v1497 = vpack.c.b16 %v1257, %v1253
    %v1498 = vpack.c.b16 %v1258, %v1254
    %v1499 = vpack.c.b16 %v1259, %v1255
    %v1500 = vpack.c.b16 %v1260, %v1256
    %v1501 = vpack.c.b16 %v1265, %v1261
    %v1502 = vpack.c.b16 %v1266, %v1262
    %v1503 = vpack.c.b16 %v1267, %v1263
    %v1504 = vpack.c.b16 %v1268, %v1264
    %v1505 = vpack.c.b16 %v1273, %v1269
    %v1506 = vpack.c.b16 %v1274, %v1270
    %v1507 = vpack.c.b16 %v1275, %v1271
    %v1508 = vpack.c.b16 %v1276, %v1272
    %v1509 = vpack.c.b16 %v1281, %v1277
    %v1510 = vpack.c.b16 %v1282, %v1278
    %v1511 = vpack.c.b16 %v1283, %v1279
    %v1512 = vpack.c.b16 %v1284, %v1280
    %v1513 = vpack.c.b16 %v1289, %v1285
    %v1514 = vpack.c.b16 %v1290, %v1286
    %v1515 = vpack.c.b16 %v1291, %v1287
    %v1516 = vpack.c.b16 %v1292, %v1288
    %v1517 = vpack.c.b16 %v1297, %v1293
    %v1518 = vpack.c.b16 %v1298, %v1294
    %v1519 = vpack.c.b16 %v1299, %v1295
    %v1520 = vpack.c.b16 %v1300, %v1296
    %v1521 = vpack.c.b16 %v1305, %v1301
    %v1522 = vpack.c.b16 %v1306, %v1302
    %v1523 = vpack.c.b16 %v1307, %v1303
    %v1524 = vpack.c.b16 %v1308, %v1304
    %v1525 = vpack.c.b16 %v1313, %v1309
    %v1526 = vpack.c.b16 %v1314, %v1310
    %v1527 = vpack.c.b16 %v1315, %v1311
    %v1528 = vpack.c.b16 %v1316, %v1312
    %v1529 = vpack.c.b16 %v1321, %v1317
    %v1530 = vpack.c.b16 %v1322, %v1318
    %v1531 = vpack.c.b16 %v1323, %v1319
    %v1532 = vpack.c.b16 %v1324, %v1320
    %v1533 = vpack.c.b16 %v1329, %v1325
    %v1534 = vpack.c.b16 %v1330, %v1326
    %v1535 = vpack.c.b16 %v1331, %v1327
    %v1536 = vpack.c.b16 %v1332, %v1328
    %v1537 = vpack.c.b16 %v1337, %v1333
    %v1538 = vpack.c.b16 %v1338, %v1334
    %v1539 = vpack.c.b16 %v1339, %v1335
    %v1540 = vpack.c.b16 %v1340, %v1336
    %v1541 = vpack.c.b16 %v1345, %v1341
    %v1542 = vpack.c.b16 %v1346, %v1342
    %v1543 = vpack.c.b16 %v1347, %v1343
    %v1544 = vpack.c.b16 %v1348, %v1344
    %v1545 = vpack.c.b16 %v1353, %v1349
    %v1546 = vpack.c.b16 %v1354, %v1350
    %v1547 = vpack.c.b16 %v1355, %v1351
    %v1548 = vpack.c.b16 %v1356, %v1352
    %1741 = vmatprep.subr.bf16.mxu0 %v1358
    %1742 = vmatpush1.bf16.msra.mxu0 %v1357
    %1743 = vmatprep.subr.bf16.mxu0 %v1362
    %1744 = vmatpush1.bf16.msra.mxu0 %v1361
    %1745 = vmatprep.subr.bf16.mxu0 %v1366
    %1746 = vmatpush1.bf16.msra.mxu0 %v1365
    %1747 = vmatprep.subr.bf16.mxu0 %v1370
    %1748 = vmatpush1.bf16.msra.mxu0 %v1369
    %1749 = vmatprep.subr.bf16.mxu0 %v1374
    %1750 = vmatpush1.bf16.msra.mxu0 %v1373
    %1751 = vmatprep.subr.bf16.mxu0 %v1378
    %1752 = vmatpush1.bf16.msra.mxu0 %v1377
    %1753 = vmatprep.subr.bf16.mxu0 %v1382
    %1754 = vmatpush1.bf16.msra.mxu0 %v1381
    %1755 = vmatprep.subr.bf16.mxu0 %v1386
    %1756 = vmatpush1.bf16.msra.mxu0 %v1385
    %1757 = vmatprep.subr.bf16.mxu0 %v1390
    %1758 = vmatpush1.bf16.msra.mxu0 %v1389
    %1759 = vmatprep.subr.bf16.mxu0 %v1394
    %1760 = vmatpush1.bf16.msra.mxu0 %v1393
    %1761 = vmatprep.subr.bf16.mxu0 %v1398
    %1762 = vmatpush1.bf16.msra.mxu0 %v1397
    %1763 = vmatprep.subr.bf16.mxu0 %v1402
    %1764 = vmatpush1.bf16.msra.mxu0 %v1401
    %1765 = vmatprep.subr.bf16.mxu0 %v1406
    %1766 = vmatpush1.bf16.msra.mxu0 %v1405
    %1767 = vmatprep.subr.bf16.mxu0 %v1410
    %1768 = vmatpush1.bf16.msra.mxu0 %v1409
    %1769 = vmatprep.subr.bf16.mxu0 %v1414
    %1770 = vmatpush1.bf16.msra.mxu0 %v1413
    %1771 = vmatprep.subr.bf16.mxu0 %v1418
    %1772 = vmatpush1.bf16.msra.mxu0 %v1417
    %1773 = vmatprep.mubr.bf16.mxu0 %v108
    %1774 = vmatmul.mubr.bf16.gmra.mrb[0].mxu0 %v107
    %v1775 = vpop.f32.mrb[0].mxu0
    %v1776 = vadd.f32 %v730, %v1775
    %v1777 = vpop.f32.mrb[0].mxu0
    %v1778 = vadd.f32 %v732, %v1777
    %v1779 = vpop.f32.mrb[0].mxu0
    %v1780 = vadd.f32 %v734, %v1779
    %v1781 = vpop.f32.mrb[0].mxu0
    %v1782 = vadd.f32 %v736, %v1781
    %1783 = vdwg.mxu0
    %1784 = vmatprep.subr.bf16.mxu0 %v1422
    %1785 = vmatpush1.bf16.msra.mxu0 %v1421
    %1786 = vmatprep.subr.bf16.mxu0 %v1426
    %1787 = vmatpush1.bf16.msra.mxu0 %v1425
    %1788 = vmatprep.subr.bf16.mxu0 %v1430
    %1789 = vmatpush1.bf16.msra.mxu0 %v1429
    %1790 = vmatprep.subr.bf16.mxu0 %v1434
    %1791 = vmatpush1.bf16.msra.mxu0 %v1433
    %1792 = vmatprep.subr.bf16.mxu0 %v1438
    %1793 = vmatpush1.bf16.msra.mxu0 %v1437
    %1794 = vmatprep.subr.bf16.mxu0 %v1442
    %1795 = vmatpush1.bf16.msra.mxu0 %v1441
    %1796 = vmatprep.subr.bf16.mxu0 %v1446
    %1797 = vmatpush1.bf16.msra.mxu0 %v1445
    %1798 = vmatprep.subr.bf16.mxu0 %v1450
    %1799 = vmatpush1.bf16.msra.mxu0 %v1449
    %1800 = vmatprep.subr.bf16.mxu0 %v1454
    %1801 = vmatpush1.bf16.msra.mxu0 %v1453
    %1802 = vmatprep.subr.bf16.mxu0 %v1458
    %1803 = vmatpush1.bf16.msra.mxu0 %v1457
    %1804 = vmatprep.subr.bf16.mxu0 %v1462
    %1805 = vmatpush1.bf16.msra.mxu0 %v1461
    %1806 = vmatprep.subr.bf16.mxu0 %v1466
    %1807 = vmatpush1.bf16.msra.mxu0 %v1465
    %1808 = vmatprep.subr.bf16.mxu0 %v1470
    %1809 = vmatpush1.bf16.msra.mxu0 %v1469
    %1810 = vmatprep.subr.bf16.mxu0 %v1474
    %1811 = vmatpush1.bf16.msra.mxu0 %v1473
    %1812 = vmatprep.subr.bf16.mxu0 %v1478
    %1813 = vmatpush1.bf16.msra.mxu0 %v1477
    %1814 = vmatprep.subr.bf16.mxu0 %v1482
    %1815 = vmatpush1.bf16.msra.mxu0 %v1481
    %1816 = vmatprep.mubr.bf16.mxu0 %v110
    %1817 = vmatmul.mubr.bf16.gmra.mrb[0].mxu0 %v109
    %v1818 = vpop.f32.mrb[0].mxu0
    %v1819 = vadd.f32 %v1776, %v1818
    %v1820 = vpop.f32.mrb[0].mxu0
    %v1821 = vadd.f32 %v1778, %v1820
    %v1822 = vpop.f32.mrb[0].mxu0
    %v1823 = vadd.f32 %v1780, %v1822
    %v1824 = vpop.f32.mrb[0].mxu0
    %v1825 = vadd.f32 %v1782, %v1824
    %1826 = vdwg.mxu0
    %1827 = vmatprep.subr.bf16.mxu0 %v1486
    %1828 = vmatpush1.bf16.msra.mxu0 %v1485
    %1829 = vmatprep.subr.bf16.mxu0 %v1490
    %1830 = vmatpush1.bf16.msra.mxu0 %v1489
    %1831 = vmatprep.subr.bf16.mxu0 %v1494
    %1832 = vmatpush1.bf16.msra.mxu0 %v1493
    %1833 = vmatprep.subr.bf16.mxu0 %v1498
    %1834 = vmatpush1.bf16.msra.mxu0 %v1497
    %1835 = vmatprep.subr.bf16.mxu0 %v1502
    %1836 = vmatpush1.bf16.msra.mxu0 %v1501
    %1837 = vmatprep.subr.bf16.mxu0 %v1506
    %1838 = vmatpush1.bf16.msra.mxu0 %v1505
    %1839 = vmatprep.subr.bf16.mxu0 %v1510
    %1840 = vmatpush1.bf16.msra.mxu0 %v1509
    %1841 = vmatprep.subr.bf16.mxu0 %v1514
    %1842 = vmatpush1.bf16.msra.mxu0 %v1513
    %1843 = vmatprep.subr.bf16.mxu0 %v1518
    %1844 = vmatpush1.bf16.msra.mxu0 %v1517
    %1845 = vmatprep.subr.bf16.mxu0 %v1522
    %1846 = vmatpush1.bf16.msra.mxu0 %v1521
    %1847 = vmatprep.subr.bf16.mxu0 %v1526
    %1848 = vmatpush1.bf16.msra.mxu0 %v1525
    %1849 = vmatprep.subr.bf16.mxu0 %v1530
    %1850 = vmatpush1.bf16.msra.mxu0 %v1529
    %1851 = vmatprep.subr.bf16.mxu0 %v1534
    %1852 = vmatpush1.bf16.msra.mxu0 %v1533
    %1853 = vmatprep.subr.bf16.mxu0 %v1538
    %1854 = vmatpush1.bf16.msra.mxu0 %v1537
    %1855 = vmatprep.subr.bf16.mxu0 %v1542
    %1856 = vmatpush1.bf16.msra.mxu0 %v1541
    %1857 = vmatprep.subr.bf16.mxu0 %v1546
    %1858 = vmatpush1.bf16.msra.mxu0 %v1545
    %1859 = vmatprep.mubr.bf16.mxu0 %v112
    %1860 = vmatmul.mubr.bf16.gmra.mrb[0].mxu0 %v111
    %v1861 = vpop.f32.mrb[0].mxu0
    %v1862 = vadd.f32 %v1819, %v1861
    %v1863 = vpop.f32.mrb[0].mxu0
    %v1864 = vadd.f32 %v1821, %v1863
    %v1865 = vpop.f32.mrb[0].mxu0
    %v1866 = vadd.f32 %v1823, %v1865
    %v1867 = vpop.f32.mrb[0].mxu0
    %v1868 = vadd.f32 %v1825, %v1867
    %1869 = vdwg.mxu0
    %1870 = vmatprep.subr.bf16.mxu0 %v1360
    %1871 = vmatpush1.bf16.msra.mxu0 %v1359
    %1872 = vmatprep.subr.bf16.mxu0 %v1364
    %1873 = vmatpush1.bf16.msra.mxu0 %v1363
    %1874 = vmatprep.subr.bf16.mxu0 %v1368
    %1875 = vmatpush1.bf16.msra.mxu0 %v1367
    %1876 = vmatprep.subr.bf16.mxu0 %v1372
    %1877 = vmatpush1.bf16.msra.mxu0 %v1371
    %1878 = vmatprep.subr.bf16.mxu0 %v1376
    %1879 = vmatpush1.bf16.msra.mxu0 %v1375
    %1880 = vmatprep.subr.bf16.mxu0 %v1380
    %1881 = vmatpush1.bf16.msra.mxu0 %v1379
    %1882 = vmatprep.subr.bf16.mxu0 %v1384
    %1883 = vmatpush1.bf16.msra.mxu0 %v1383
    %1884 = vmatprep.subr.bf16.mxu0 %v1388
    %1885 = vmatpush1.bf16.msra.mxu0 %v1387
    %1886 = vmatprep.subr.bf16.mxu0 %v1392
    %1887 = vmatpush1.bf16.msra.mxu0 %v1391
    %1888 = vmatprep.subr.bf16.mxu0 %v1396
    %1889 = vmatpush1.bf16.msra.mxu0 %v1395
    %1890 = vmatprep.subr.bf16.mxu0 %v1400
    %1891 = vmatpush1.bf16.msra.mxu0 %v1399
    %1892 = vmatprep.subr.bf16.mxu0 %v1404
    %1893 = vmatpush1.bf16.msra.mxu0 %v1403
    %1894 = vmatprep.subr.bf16.mxu0 %v1408
    %1895 = vmatpush1.bf16.msra.mxu0 %v1407
    %1896 = vmatprep.subr.bf16.mxu0 %v1412
    %1897 = vmatpush1.bf16.msra.mxu0 %v1411
    %1898 = vmatprep.subr.bf16.mxu0 %v1416
    %1899 = vmatpush1.bf16.msra.mxu0 %v1415
    %1900 = vmatprep.subr.bf16.mxu0 %v1420
    %1901 = vmatpush1.bf16.msra.mxu0 %v1419
    %1902 = vmatprep.mubr.bf16.mxu0 %v108
    %1903 = vmatmul.mubr.bf16.gmra.mrb[0].mxu0 %v107
    %v1904 = vpop.f32.mrb[0].mxu0
    %v1905 = vadd.f32 %v773, %v1904
    %v1906 = vpop.f32.mrb[0].mxu0
    %v1907 = vadd.f32 %v775, %v1906
    %v1908 = vpop.f32.mrb[0].mxu0
    %v1909 = vadd.f32 %v777, %v1908
    %v1910 = vpop.f32.mrb[0].mxu0
    %v1911 = vadd.f32 %v779, %v1910
    %1912 = vdwg.mxu0
    %1913 = vmatprep.subr.bf16.mxu0 %v1424
    %1914 = vmatpush1.bf16.msra.mxu0 %v1423
    %1915 = vmatprep.subr.bf16.mxu0 %v1428
    %1916 = vmatpush1.bf16.msra.mxu0 %v1427
    %1917 = vmatprep.subr.bf16.mxu0 %v1432
    %1918 = vmatpush1.bf16.msra.mxu0 %v1431
    %1919 = vmatprep.subr.bf16.mxu0 %v1436
    %1920 = vmatpush1.bf16.msra.mxu0 %v1435
    %1921 = vmatprep.subr.bf16.mxu0 %v1440
    %1922 = vmatpush1.bf16.msra.mxu0 %v1439
    %1923 = vmatprep.subr.bf16.mxu0 %v1444
    %1924 = vmatpush1.bf16.msra.mxu0 %v1443
    %1925 = vmatprep.subr.bf16.mxu0 %v1448
    %1926 = vmatpush1.bf16.msra.mxu0 %v1447
    %1927 = vmatprep.subr.bf16.mxu0 %v1452
    %1928 = vmatpush1.bf16.msra.mxu0 %v1451
    %1929 = vmatprep.subr.bf16.mxu0 %v1456
    %1930 = vmatpush1.bf16.msra.mxu0 %v1455
    %1931 = vmatprep.subr.bf16.mxu0 %v1460
    %1932 = vmatpush1.bf16.msra.mxu0 %v1459
    %1933 = vmatprep.subr.bf16.mxu0 %v1464
    %1934 = vmatpush1.bf16.msra.mxu0 %v1463
    %1935 = vmatprep.subr.bf16.mxu0 %v1468
    %1936 = vmatpush1.bf16.msra.mxu0 %v1467
    %1937 = vmatprep.subr.bf16.mxu0 %v1472
    %1938 = vmatpush1.bf16.msra.mxu0 %v1471
    %1939 = vmatprep.subr.bf16.mxu0 %v1476
    %1940 = vmatpush1.bf16.msra.mxu0 %v1475
    %1941 = vmatprep.subr.bf16.mxu0 %v1480
    %1942 = vmatpush1.bf16.msra.mxu0 %v1479
    %1943 = vmatprep.subr.bf16.mxu0 %v1484
    %1944 = vmatpush1.bf16.msra.mxu0 %v1483
    %1945 = vmatprep.mubr.bf16.mxu0 %v110
    %1946 = vmatmul.mubr.bf16.gmra.mrb[0].mxu0 %v109
    %v1947 = vpop.f32.mrb[0].mxu0
    %v1948 = vadd.f32 %v1905, %v1947
    %v1949 = vpop.f32.mrb[0].mxu0
    %v1950 = vadd.f32 %v1907, %v1949
    %v1951 = vpop.f32.mrb[0].mxu0
    %v1952 = vadd.f32 %v1909, %v1951
    %v1953 = vpop.f32.mrb[0].mxu0
    %v1954 = vadd.f32 %v1911, %v1953
    %1955 = vdwg.mxu0
    %1956 = vmatprep.subr.bf16.mxu0 %v1488
    %1957 = vmatpush1.bf16.msra.mxu0 %v1487
    %1958 = vmatprep.subr.bf16.mxu0 %v1492
    %1959 = vmatpush1.bf16.msra.mxu0 %v1491
    %1960 = vmatprep.subr.bf16.mxu0 %v1496
    %1961 = vmatpush1.bf16.msra.mxu0 %v1495
    %1962 = vmatprep.subr.bf16.mxu0 %v1500
    %1963 = vmatpush1.bf16.msra.mxu0 %v1499
    %1964 = vmatprep.subr.bf16.mxu0 %v1504
    %1965 = vmatpush1.bf16.msra.mxu0 %v1503
    %1966 = vmatprep.subr.bf16.mxu0 %v1508
    %1967 = vmatpush1.bf16.msra.mxu0 %v1507
    %1968 = vmatprep.subr.bf16.mxu0 %v1512
    %1969 = vmatpush1.bf16.msra.mxu0 %v1511
    %1970 = vmatprep.subr.bf16.mxu0 %v1516
    %1971 = vmatpush1.bf16.msra.mxu0 %v1515
    %1972 = vmatprep.subr.bf16.mxu0 %v1520
    %1973 = vmatpush1.bf16.msra.mxu0 %v1519
    %1974 = vmatprep.subr.bf16.mxu0 %v1524
    %1975 = vmatpush1.bf16.msra.mxu0 %v1523
    %1976 = vmatprep.subr.bf16.mxu0 %v1528
    %1977 = vmatpush1.bf16.msra.mxu0 %v1527
    %1978 = vmatprep.subr.bf16.mxu0 %v1532
    %1979 = vmatpush1.bf16.msra.mxu0 %v1531
    %1980 = vmatprep.subr.bf16.mxu0 %v1536
    %1981 = vmatpush1.bf16.msra.mxu0 %v1535
    %1982 = vmatprep.subr.bf16.mxu0 %v1540
    %1983 = vmatpush1.bf16.msra.mxu0 %v1539
    %1984 = vmatprep.subr.bf16.mxu0 %v1544
    %1985 = vmatpush1.bf16.msra.mxu0 %v1543
    %1986 = vmatprep.subr.bf16.mxu0 %v1548
    %1987 = vmatpush1.bf16.msra.mxu0 %v1547
    %1988 = vmatprep.mubr.bf16.mxu0 %v112
    %1989 = vmatmul.mubr.bf16.gmra.mrb[0].mxu0 %v111
    %v1990 = vpop.f32.mrb[0].mxu0
    %v1991 = vadd.f32 %v1948, %v1990
    %v1992 = vpop.f32.mrb[0].mxu0
    %v1993 = vadd.f32 %v1950, %v1992
    %v1994 = vpop.f32.mrb[0].mxu0
    %v1995 = vadd.f32 %v1952, %v1994
    %v1996 = vpop.f32.mrb[0].mxu0
    %v1997 = vadd.f32 %v1954, %v1996
    %1998 = vdwg.mxu0
    %v1999 = vld [vmem:[%s4] sm:$0xf]
    %v2001 = vlaneseq
    %v2002 = vshrl.u32 %v2001, 7
    %v2003 = vsub.s32 0, %v2002
    %v2004 = vrot.slane %v1999, %v2003
    %v2005 = vlaneseq
    %v2006 = vshrl.u32 %v2005, 7
    %v2007 = vsub.s32 1, %v2006
    %v2008 = vrot.slane %v1999, %v2007
    %v2009 = vlaneseq
    %v2010 = vshrl.u32 %v2009, 7
    %v2011 = vsub.s32 2, %v2010
    %v2012 = vrot.slane %v1999, %v2011
    %v2013 = vlaneseq
    %v2014 = vshrl.u32 %v2013, 7
    %v2015 = vsub.s32 3, %v2014
    %v2016 = vrot.slane %v1999, %v2015
    %v2021 = vadd.f32 %v1862, %v2004
    %v2022 = vadd.f32 %v1864, %v2008
    %v2023 = vadd.f32 %v1991, %v2012
    %v2024 = vadd.f32 %v1993, %v2016
    %v2025 = vadd.f32 %v1866, %v2004
    %v2026 = vadd.f32 %v1868, %v2008
    %v2027 = vadd.f32 %v1995, %v2012
    %v2028 = vadd.f32 %v1997, %v2016
    %v2029 = vmax.f32 %v2021, 0.0
    %v2030 = vmax.f32 %v2022, 0.0
    %v2031 = vmax.f32 %v2023, 0.0
    %v2032 = vmax.f32 %v2024, 0.0
    %v2033 = vmax.f32 %v2025, 0.0
    %v2034 = vmax.f32 %v2026, 0.0
    %v2035 = vmax.f32 %v2027, 0.0
    %v2036 = vmax.f32 %v2028, 0.0
    %v2037 = vpack.c.bf16 %v2033, %v2029
    %v2038 = vpack.c.bf16 %v2034, %v2030
    %v2039 = vpack.c.bf16 %v2035, %v2031
    %v2040 = vpack.c.bf16 %v2036, %v2032
    %v2041 = vld [vmem:[#allocation9] sm:$0xf]
    %v2042 = vld [vmem:[#allocation9 + $0x4] sm:$0xf]
    %v2043 = vld [vmem:[#allocation9 + $0x8] sm:$0xf]
    %v2044 = vld [vmem:[#allocation9 + $0xc] sm:$0xf]
    %v2045 = vld [vmem:[#allocation9 + $0x10] sm:$0xf]
    %v2046 = vld [vmem:[#allocation9 + $0x14] sm:$0xf]
    %v2047 = vld [vmem:[#allocation9 + $0x18] sm:$0xf]
    %v2048 = vld [vmem:[#allocation9 + $0x1c] sm:$0xf]
    %v2049 = vld [vmem:[#allocation9 + $0x20] sm:$0xf]
    %v2050 = vld [vmem:[#allocation9 + $0x24] sm:$0xf]
    %v2051 = vld [vmem:[#allocation9 + $0x28] sm:$0xf]
    %v2052 = vld [vmem:[#allocation9 + $0x2c] sm:$0xf]
    %v2053 = vld [vmem:[#allocation9 + $0x30] sm:$0xf]
    %v2054 = vld [vmem:[#allocation9 + $0x34] sm:$0xf]
    %v2055 = vld [vmem:[#allocation9 + $0x38] sm:$0xf]
    %v2056 = vld [vmem:[#allocation9 + $0x3c] sm:$0xf]
    %v2057 = vld [vmem:[#allocation9 + $0x40] sm:$0xf]
    %v2058 = vld [vmem:[#allocation9 + $0x44] sm:$0xf]
    %v2059 = vld [vmem:[#allocation9 + $0x48] sm:$0xf]
    %v2060 = vld [vmem:[#allocation9 + $0x4c] sm:$0xf]
    %v2061 = vld [vmem:[#allocation9 + $0x50] sm:$0xf]
    %v2062 = vld [vmem:[#allocation9 + $0x54] sm:$0xf]
    %v2063 = vld [vmem:[#allocation9 + $0x58] sm:$0xf]
    %v2064 = vld [vmem:[#allocation9 + $0x5c] sm:$0xf]
    %v2065 = vld [vmem:[#allocation9 + $0x60] sm:$0xf]
    %v2066 = vld [vmem:[#allocation9 + $0x64] sm:$0xf]
    %v2067 = vld [vmem:[#allocation9 + $0x68] sm:$0xf]
    %v2068 = vld [vmem:[#allocation9 + $0x6c] sm:$0xf]
    %v2069 = vld [vmem:[#allocation9 + $0x70] sm:$0xf]
    %v2070 = vld [vmem:[#allocation9 + $0x74] sm:$0xf]
    %v2071 = vld [vmem:[#allocation9 + $0x78] sm:$0xf]
    %v2072 = vld [vmem:[#allocation9 + $0x7c] sm:$0xf]
    %v2073 = vld [vmem:[#allocation9 + $0x80] sm:$0xf]
    %v2074 = vld [vmem:[#allocation9 + $0x84] sm:$0xf]
    %v2075 = vld [vmem:[#allocation9 + $0x88] sm:$0xf]
    %v2076 = vld [vmem:[#allocation9 + $0x8c] sm:$0xf]
    %v2077 = vld [vmem:[#allocation9 + $0x90] sm:$0xf]
    %v2078 = vld [vmem:[#allocation9 + $0x94] sm:$0xf]
    %v2079 = vld [vmem:[#allocation9 + $0x98] sm:$0xf]
    %v2080 = vld [vmem:[#allocation9 + $0x9c] sm:$0xf]
    %v2081 = vld [vmem:[#allocation9 + $0xa0] sm:$0xf]
    %v2082 = vld [vmem:[#allocation9 + $0xa4] sm:$0xf]
    %v2083 = vld [vmem:[#allocation9 + $0xa8] sm:$0xf]
    %v2084 = vld [vmem:[#allocation9 + $0xac] sm:$0xf]
    %v2085 = vld [vmem:[#allocation9 + $0xb0] sm:$0xf]
    %v2086 = vld [vmem:[#allocation9 + $0xb4] sm:$0xf]
    %v2087 = vld [vmem:[#allocation9 + $0xb8] sm:$0xf]
    %v2088 = vld [vmem:[#allocation9 + $0xbc] sm:$0xf]
    %v2089 = vld [vmem:[#allocation9 + $0xc0] sm:$0xf]
    %v2090 = vld [vmem:[#allocation9 + $0xc4] sm:$0xf]
    %v2091 = vld [vmem:[#allocation9 + $0xc8] sm:$0xf]
    %v2092 = vld [vmem:[#allocation9 + $0xcc] sm:$0xf]
    %v2093 = vld [vmem:[#allocation9 + $0xd0] sm:$0xf]
    %v2094 = vld [vmem:[#allocation9 + $0xd4] sm:$0xf]
    %v2095 = vld [vmem:[#allocation9 + $0xd8] sm:$0xf]
    %v2096 = vld [vmem:[#allocation9 + $0xdc] sm:$0xf]
    %v2097 = vld [vmem:[#allocation9 + $0xe0] sm:$0xf]
    %v2098 = vld [vmem:[#allocation9 + $0xe4] sm:$0xf]
    %v2099 = vld [vmem:[#allocation9 + $0xe8] sm:$0xf]
    %v2100 = vld [vmem:[#allocation9 + $0xec] sm:$0xf]
    %v2101 = vld [vmem:[#allocation9 + $0xf0] sm:$0xf]
    %v2102 = vld [vmem:[#allocation9 + $0xf4] sm:$0xf]
    %v2103 = vld [vmem:[#allocation9 + $0xf8] sm:$0xf]
    %v2104 = vld [vmem:[#allocation9 + $0xfc] sm:$0xf]
    %v2105 = vld [vmem:[%s6] sm:$0x1]
    %v2107 = vlaneseq
    %v2108 = vshrl.u32 %v2107, 7
    %v2109 = vsub.s32 0, %v2108
    %v2110 = vrot.slane %v2105, %v2109
    %v2176 = vunpack.c.l.b16 %v2041
    %v2177 = vunpack.c.l.b16 %v2042
    %v2178 = vunpack.c.l.b16 %v2043
    %v2179 = vunpack.c.l.b16 %v2044
    %v2180 = vunpack.c.l.b16 %v2045
    %v2181 = vunpack.c.l.b16 %v2046
    %v2182 = vunpack.c.l.b16 %v2047
    %v2183 = vunpack.c.l.b16 %v2048
    %v2184 = vunpack.c.l.b16 %v2049
    %v2185 = vunpack.c.l.b16 %v2050
    %v2186 = vunpack.c.l.b16 %v2051
    %v2187 = vunpack.c.l.b16 %v2052
    %v2188 = vunpack.c.l.b16 %v2053
    %v2189 = vunpack.c.l.b16 %v2054
    %v2190 = vunpack.c.l.b16 %v2055
    %v2191 = vunpack.c.l.b16 %v2056
    %v2192 = vunpack.c.l.b16 %v2057
    %v2193 = vunpack.c.l.b16 %v2058
    %v2194 = vunpack.c.l.b16 %v2059
    %v2195 = vunpack.c.l.b16 %v2060
    %v2196 = vunpack.c.l.b16 %v2061
    %v2197 = vunpack.c.l.b16 %v2062
    %v2198 = vunpack.c.l.b16 %v2063
    %v2199 = vunpack.c.l.b16 %v2064
    %v2200 = vunpack.c.l.b16 %v2065
    %v2201 = vunpack.c.l.b16 %v2066
    %v2202 = vunpack.c.l.b16 %v2067
    %v2203 = vunpack.c.l.b16 %v2068
    %v2204 = vunpack.c.l.b16 %v2069
    %v2205 = vunpack.c.l.b16 %v2070
    %v2206 = vunpack.c.l.b16 %v2071
    %v2207 = vunpack.c.l.b16 %v2072
    %v2208 = vunpack.c.l.b16 %v2073
    %v2209 = vunpack.c.l.b16 %v2074
    %v2210 = vunpack.c.l.b16 %v2075
    %v2211 = vunpack.c.l.b16 %v2076
    %v2212 = vunpack.c.l.b16 %v2077
    %v2213 = vunpack.c.l.b16 %v2078
    %v2214 = vunpack.c.l.b16 %v2079
    %v2215 = vunpack.c.l.b16 %v2080
    %v2216 = vunpack.c.l.b16 %v2081
    %v2217 = vunpack.c.l.b16 %v2082
    %v2218 = vunpack.c.l.b16 %v2083
    %v2219 = vunpack.c.l.b16 %v2084
    %v2220 = vunpack.c.l.b16 %v2085
    %v2221 = vunpack.c.l.b16 %v2086
    %v2222 = vunpack.c.l.b16 %v2087
    %v2223 = vunpack.c.l.b16 %v2088
    %v2224 = vunpack.c.l.b16 %v2089
    %v2225 = vunpack.c.l.b16 %v2090
    %v2226 = vunpack.c.l.b16 %v2091
    %v2227 = vunpack.c.l.b16 %v2092
    %v2228 = vunpack.c.l.b16 %v2093
    %v2229 = vunpack.c.l.b16 %v2094
    %v2230 = vunpack.c.l.b16 %v2095
    %v2231 = vunpack.c.l.b16 %v2096
    %v2232 = vunpack.c.l.b16 %v2097
    %v2233 = vunpack.c.l.b16 %v2098
    %v2234 = vunpack.c.l.b16 %v2099
    %v2235 = vunpack.c.l.b16 %v2100
    %v2236 = vunpack.c.l.b16 %v2101
    %v2237 = vunpack.c.l.b16 %v2102
    %v2238 = vunpack.c.l.b16 %v2103
    %v2239 = vunpack.c.l.b16 %v2104
    %v2240 = vpack.c.b16 %v2177, %v2176
    %v2241 = vpack.c.b16 %v2179, %v2178
    %v2242 = vpack.c.b16 %v2181, %v2180
    %v2243 = vpack.c.b16 %v2183, %v2182
    %v2244 = vpack.c.b16 %v2185, %v2184
    %v2245 = vpack.c.b16 %v2187, %v2186
    %v2246 = vpack.c.b16 %v2189, %v2188
    %v2247 = vpack.c.b16 %v2191, %v2190
    %v2248 = vpack.c.b16 %v2193, %v2192
    %v2249 = vpack.c.b16 %v2195, %v2194
    %v2250 = vpack.c.b16 %v2197, %v2196
    %v2251 = vpack.c.b16 %v2199, %v2198
    %v2252 = vpack.c.b16 %v2201, %v2200
    %v2253 = vpack.c.b16 %v2203, %v2202
    %v2254 = vpack.c.b16 %v2205, %v2204
    %v2255 = vpack.c.b16 %v2207, %v2206
    %v2256 = vpack.c.b16 %v2209, %v2208
    %v2257 = vpack.c.b16 %v2211, %v2210
    %v2258 = vpack.c.b16 %v2213, %v2212
    %v2259 = vpack.c.b16 %v2215, %v2214
    %v2260 = vpack.c.b16 %v2217, %v2216
    %v2261 = vpack.c.b16 %v2219, %v2218
    %v2262 = vpack.c.b16 %v2221, %v2220
    %v2263 = vpack.c.b16 %v2223, %v2222
    %v2264 = vpack.c.b16 %v2225, %v2224
    %v2265 = vpack.c.b16 %v2227, %v2226
    %v2266 = vpack.c.b16 %v2229, %v2228
    %v2267 = vpack.c.b16 %v2231, %v2230
    %v2268 = vpack.c.b16 %v2233, %v2232
    %v2269 = vpack.c.b16 %v2235, %v2234
    %v2270 = vpack.c.b16 %v2237, %v2236
    %v2271 = vpack.c.b16 %v2239, %v2238
    %2304 = vmatprep.subr.bf16.mxu0 0
    %2305 = vmatpush1.bf16.msra.mxu0 %v2240
    %2306 = vmatprep.subr.bf16.mxu0 0
    %2307 = vmatpush1.bf16.msra.mxu0 %v2241
    %2308 = vmatprep.subr.bf16.mxu0 0
    %2309 = vmatpush1.bf16.msra.mxu0 %v2242
    %2310 = vmatprep.subr.bf16.mxu0 0
    %2311 = vmatpush1.bf16.msra.mxu0 %v2243
    %2312 = vmatprep.subr.bf16.mxu0 0
    %2313 = vmatpush1.bf16.msra.mxu0 %v2244
    %2314 = vmatprep.subr.bf16.mxu0 0
    %2315 = vmatpush1.bf16.msra.mxu0 %v2245
    %2316 = vmatprep.subr.bf16.mxu0 0
    %2317 = vmatpush1.bf16.msra.mxu0 %v2246
    %2318 = vmatprep.subr.bf16.mxu0 0
    %2319 = vmatpush1.bf16.msra.mxu0 %v2247
    %2320 = vmatprep.subr.bf16.mxu0 0
    %2321 = vmatpush1.bf16.msra.mxu0 %v2248
    %2322 = vmatprep.subr.bf16.mxu0 0
    %2323 = vmatpush1.bf16.msra.mxu0 %v2249
    %2324 = vmatprep.subr.bf16.mxu0 0
    %2325 = vmatpush1.bf16.msra.mxu0 %v2250
    %2326 = vmatprep.subr.bf16.mxu0 0
    %2327 = vmatpush1.bf16.msra.mxu0 %v2251
    %2328 = vmatprep.subr.bf16.mxu0 0
    %2329 = vmatpush1.bf16.msra.mxu0 %v2252
    %2330 = vmatprep.subr.bf16.mxu0 0
    %2331 = vmatpush1.bf16.msra.mxu0 %v2253
    %2332 = vmatprep.subr.bf16.mxu0 0
    %2333 = vmatpush1.bf16.msra.mxu0 %v2254
    %2334 = vmatprep.subr.bf16.mxu0 0
    %2335 = vmatpush1.bf16.msra.mxu0 %v2255
    %2336 = vmatprep.mubr.bf16.mxu0 %v2038
    %2337 = vmatmul.mubr.bf16.gmra.mrb[0].mxu0 %v2037
    %v2338 = vpop.f32.mrb[0].mxu0
    %v2339 = vadd.f32 %v2110, %v2338
    %v2340 = vpop.f32.mrb[0].mxu0
    %v2341 = vpop.f32.mrb[0].mxu0
    %v2342 = vadd.f32 %v2110, %v2341
    %v2343 = vpop.f32.mrb[0].mxu0
    %2344 = vdwg.mxu0
    %2345 = vmatprep.subr.bf16.mxu0 0
    %2346 = vmatpush1.bf16.msra.mxu0 %v2256
    %2347 = vmatprep.subr.bf16.mxu0 0
    %2348 = vmatpush1.bf16.msra.mxu0 %v2257
    %2349 = vmatprep.subr.bf16.mxu0 0
    %2350 = vmatpush1.bf16.msra.mxu0 %v2258
    %2351 = vmatprep.subr.bf16.mxu0 0
    %2352 = vmatpush1.bf16.msra.mxu0 %v2259
    %2353 = vmatprep.subr.bf16.mxu0 0
    %2354 = vmatpush1.bf16.msra.mxu0 %v2260
    %2355 = vmatprep.subr.bf16.mxu0 0
    %2356 = vmatpush1.bf16.msra.mxu0 %v2261
    %2357 = vmatprep.subr.bf16.mxu0 0
    %2358 = vmatpush1.bf16.msra.mxu0 %v2262
    %2359 = vmatprep.subr.bf16.mxu0 0
    %2360 = vmatpush1.bf16.msra.mxu0 %v2263
    %2361 = vmatprep.subr.bf16.mxu0 0
    %2362 = vmatpush1.bf16.msra.mxu0 %v2264
    %2363 = vmatprep.subr.bf16.mxu0 0
    %2364 = vmatpush1.bf16.msra.mxu0 %v2265
    %2365 = vmatprep.subr.bf16.mxu0 0
    %2366 = vmatpush1.bf16.msra.mxu0 %v2266
    %2367 = vmatprep.subr.bf16.mxu0 0
    %2368 = vmatpush1.bf16.msra.mxu0 %v2267
    %2369 = vmatprep.subr.bf16.mxu0 0
    %2370 = vmatpush1.bf16.msra.mxu0 %v2268
    %2371 = vmatprep.subr.bf16.mxu0 0
    %2372 = vmatpush1.bf16.msra.mxu0 %v2269
    %2373 = vmatprep.subr.bf16.mxu0 0
    %2374 = vmatpush1.bf16.msra.mxu0 %v2270
    %2375 = vmatprep.subr.bf16.mxu0 0
    %2376 = vmatpush1.bf16.msra.mxu0 %v2271
    %2377 = vmatprep.mubr.bf16.mxu0 %v2040
    %2378 = vmatmul.mubr.bf16.gmra.mrb[0].mxu0 %v2039
    %v2379 = vpop.f32.mrb[0].mxu0
    %v2380 = vadd.f32 %v2339, %v2379
    %v2381 = vpop.f32.mrb[0].mxu0
    %v2382 = vpop.f32.mrb[0].mxu0
    %v2383 = vadd.f32 %v2342, %v2382
    %v2384 = vpop.f32.mrb[0].mxu0
    %2385 = vdwg.mxu0
    %v2386 = vpack.c.bf16 %v2383, %v2380
    %v2388 = vunpack.c.l.b16 %v2386
    %v2389 = vunpack.c.h.b16 %v2386
    %v2390 = vpack.c.b16 %v2388, %v2388
    %v2391 = vpack.c.b16 %v2389, %v2389
    %2394 = vst [vmem:[%s7] sm:$0xf] %v2390
    %2395 = vst [vmem:[%s7 + $0x4] sm:$0xf] %v2391
    // Predicated region
    $region50: #{video_audio_concat_forward.1} parent=1 // pred_check
      _
    $region51: #{video_audio_concat_forward.1} parent=1 // pred_check_branch
      %2397 = sbr.rel (0) target = $region53
    $region52: #{video_audio_concat_forward.1} parent=1 // pred_region
      _
    $region53: #{video_audio_concat_forward.1} parent=1 // pred_fallthru
      _
    // Predicated region
    $region54: #{video_audio_concat_forward.1} parent=1 // pred_check
      _
    $region55: #{video_audio_concat_forward.1} parent=1 // pred_check_branch
      %2399 = sbr.rel (0) target = $region57
    $region56: #{video_audio_concat_forward.1} parent=1 // pred_region
      _
    $region57: #{video_audio_concat_forward.1} parent=1 // pred_fallthru
      _
    %2400 = vsyncpa [#allocation3], 1
    %2401 = vsyncpa [#allocation5], 1
    %2402 = vsyncpa [#allocation8], 1

</llo_original>
